<compile_context>
chip_gen: v7x
topology: tpu7x:2x2x1
jax: 0.10.0
libtpu: 0.0.40
codegen_flags: <defaults>
</compile_context>

<pallas_src>
import jax
import jax.numpy as jnp
from jax.experimental import pallas as pl
from jax.experimental.pallas import tpu as pltpu


LAYER_SPEC = [(64, 3, 1), (128, 4, 2), (256, 6, 2), (512, 3, 2)]  # (width, blocks, stride)
CPAD = 128  # narrow (64-wide) channel dims get zero-padded up to one lane register


def _ceil_to(x, m):
    return ((x + m - 1) // m) * m


# ----------------------------------------------------------------------------
# Fused matmul kernel: out = maybe_relu(A @ B + bias [+ residual])
# A/B bf16 (MXU), accumulate + epilogue in f32.
# ----------------------------------------------------------------------------

def _make_mm_kernel(relu, has_res, multi_k):
    def kernel(*refs):
        if multi_k:
            if has_res:
                a_ref, b_ref, c_ref, r_ref, o_ref, acc_ref = refs
            else:
                a_ref, b_ref, c_ref, o_ref, acc_ref = refs

            @pl.when(pl.program_id(2) == 0)
            def _():
                acc_ref[...] = jnp.zeros_like(acc_ref)

            acc_ref[...] += jnp.dot(a_ref[...], b_ref[...],
                                    preferred_element_type=jnp.float32)

            @pl.when(pl.program_id(2) == pl.num_programs(2) - 1)
            def _():
                y = acc_ref[...] + c_ref[...]
                if has_res:
                    y = y + r_ref[...].astype(jnp.float32)
                if relu:
                    y = jnp.maximum(y, 0.0)
                o_ref[...] = y.astype(o_ref.dtype)
        else:
            if has_res:
                a_ref, b_ref, c_ref, r_ref, o_ref = refs
            else:
                a_ref, b_ref, c_ref, o_ref = refs
            y = jnp.dot(a_ref[...], b_ref[...],
                        preferred_element_type=jnp.float32) + c_ref[...]
            if has_res:
                y = y + r_ref[...].astype(jnp.float32)
            if relu:
                y = jnp.maximum(y, 0.0)
            o_ref[...] = y.astype(o_ref.dtype)
    return kernel


def fused_matmul(a, b, bias, residual=None, relu=False, out_dtype=jnp.bfloat16):
    """out = maybe_relu(a @ b + bias [+ residual]).  a,b bf16; bias f32."""
    M, K = a.shape
    K2, N = b.shape
    assert K == K2

    # --- tile selection -------------------------------------------------
    if M <= 512:
        tm, Mp = M, M
    else:
        tm = 512
        Mp = _ceil_to(M, tm)
    # Full-K single tile up to 2048: no k grid axis / no f32 scratch RMW.
    # (512x2048 bf16 A + 2048x256 bf16 B double-buffered is ~6 MiB.)
    if K <= 2048:
        tk, Kp = K, K
    else:
        tk = 2048 if K % 2048 == 0 else (1024 if K % 1024 == 0 else 512)
        Kp = _ceil_to(K, tk)
    # Cap tn at 256 so N>=512 layers expose >=2 parallel output tiles (v7x).
    if N <= 256:
        tn, Np = N, N
    else:
        tn = 256 if N % 256 == 0 else 128
        Np = _ceil_to(N, tn)

    a_p = a if (Mp == M and Kp == K) else jnp.pad(a, ((0, Mp - M), (0, Kp - K)))
    b_p = b if (Kp == K and Np == N) else jnp.pad(b, ((0, Kp - K), (0, Np - N)))
    bias2 = bias.reshape(1, N)
    bias_p = bias2 if Np == N else jnp.pad(bias2, ((0, 0), (0, Np - N)))

    has_res = residual is not None
    args = [a_p, b_p, bias_p]
    if has_res:
        r_p = residual if (Mp == M and Np == N) else jnp.pad(
            residual, ((0, Mp - M), (0, Np - N)))
        args.append(r_p)

    nk = Kp // tk
    multi_k = nk > 1
    if multi_k:
        grid = (Mp // tm, Np // tn, nk)
        in_specs = [pl.BlockSpec((tm, tk), lambda i, j, k: (i, k)),
                    pl.BlockSpec((tk, tn), lambda i, j, k: (k, j)),
                    pl.BlockSpec((1, tn), lambda i, j, k: (0, j))]
        if has_res:
            in_specs.append(pl.BlockSpec((tm, tn), lambda i, j, k: (i, j)))
        out_spec = pl.BlockSpec((tm, tn), lambda i, j, k: (i, j))
        scratch = [pltpu.VMEM((tm, tn), jnp.float32)]
        sem = ("parallel", "parallel", "arbitrary")
    else:
        grid = (Mp // tm, Np // tn)
        in_specs = [pl.BlockSpec((tm, tk), lambda i, j: (i, 0)),
                    pl.BlockSpec((tk, tn), lambda i, j: (0, j)),
                    pl.BlockSpec((1, tn), lambda i, j: (0, j))]
        if has_res:
            in_specs.append(pl.BlockSpec((tm, tn), lambda i, j: (i, j)))
        out_spec = pl.BlockSpec((tm, tn), lambda i, j: (i, j))
        scratch = []
        sem = ("parallel", "parallel")

    out = pl.pallas_call(
        _make_mm_kernel(relu, has_res, multi_k),
        out_shape=jax.ShapeDtypeStruct((Mp, Np), out_dtype),
        grid_spec=pltpu.PrefetchScalarGridSpec(
            num_scalar_prefetch=0, grid=grid,
            in_specs=in_specs, out_specs=out_spec, scratch_shapes=scratch),
        compiler_params=pltpu.CompilerParams(dimension_semantics=sem),
        cost_estimate=pl.CostEstimate(
            flops=2 * Mp * Kp * Np, transcendentals=0,
            bytes_accessed=(a_p.size * a_p.dtype.itemsize
                            + b_p.size * b_p.dtype.itemsize
                            + Mp * Np * jnp.dtype(out_dtype).itemsize)),
    )(*args)
    if Mp != M or Np != N:
        out = out[:M, :N]
    return out


# ----------------------------------------------------------------------------
# Slab builder: rearrange the padded NHWC activation (phase-decomposed for
# stride 2) so that every 3x3 tap is a contiguous static row-slice of a flat
# (N, L, C) array.  Wb is padded to a multiple of 8 so the di*Wb tap offsets
# (and M = Ho*Wb) are sublane-aligned.
# ----------------------------------------------------------------------------

def _build_slab(x, ksize, stride, pad, pad_value):
    N, H, W, C = x.shape
    assert stride in (1, 2)
    Ho = (H + 2 * pad - ksize) // stride + 1
    Wo = (W + 2 * pad - ksize) // stride + 1
    oi_max = (ksize - 1) // stride
    oj_max = (ksize - 1) // stride
    xp = jnp.pad(x, ((0, 0), (pad, pad), (pad, pad), (0, 0)),
                 constant_values=pad_value)
    if stride == 1:
        phases = [xp]
    else:
        phases = [xp[:, a::stride, b::stride, :]
                  for a in range(stride) for b in range(stride)]
    Wb = _ceil_to(max(ph.shape[2] for ph in phases), 8)   # sublane alignment
    Hb = Ho + oi_max + (1 if oj_max > 0 else 0)
    padded = []
    for ph in phases:
        dh, dw = Hb - ph.shape[1], Wb - ph.shape[2]
        if dh or dw:
            ph = jnp.pad(ph, ((0, 0), (0, dh), (0, dw), (0, 0)),
                         constant_values=pad_value)
        padded.append(ph)
    slab = jnp.stack(padded, axis=1).reshape(N, len(phases) * Hb * Wb, C)
    starts = []
    for di in range(ksize):
        for dj in range(ksize):
            p = (di % stride) * stride + (dj % stride) if stride > 1 else 0
            starts.append(p * Hb * Wb + (di // stride) * Wb + (dj // stride))
    return slab, tuple(starts), Ho, Wo, Wb


# ----------------------------------------------------------------------------
# Direct 3x3 conv + folded-BN bias + ReLU kernel: 9 tap matmuls accumulated in
# a value-level f32 running sum (one store per output tile, no scratch RMW).
# ----------------------------------------------------------------------------

def _make_direct_conv_kernel(starts, M, relu):
    def kernel(x_ref, w_ref, b_ref, o_ref):
        acc = jnp.dot(x_ref[starts[0]:starts[0] + M, :], w_ref[0],
                      preferred_element_type=jnp.float32)
        for t in range(1, len(starts)):
            st = starts[t]
            acc = acc + jnp.dot(x_ref[st:st + M, :], w_ref[t],
                                preferred_element_type=jnp.float32)
        y = acc + b_ref[...]
        if relu:
            y = jnp.maximum(y, 0.0)
        o_ref[...] = y.astype(o_ref.dtype)
    return kernel


def conv3x3_bn_relu(x, w9, bias, stride):
    """x: NHWC bf16, w9: (9, Cin, Cout) bf16 (BN-folded), bias: (Cout,) f32."""
    N, H, W, Cin = x.shape
    Cout = w9.shape[2]
    slab, starts, Ho, Wo, Wb = _build_slab(x, 3, stride, 1, 0.0)
    L = slab.shape[1]
    M = Ho * Wb                              # multiple of 8 by construction
    tc = min(Cout, 256)
    grid = (N, Cout // tc)
    out = pl.pallas_call(
        _make_direct_conv_kernel(starts, M, True),
        out_shape=jax.ShapeDtypeStruct((N, M, Cout), jnp.bfloat16),
        grid_spec=pltpu.PrefetchScalarGridSpec(
            num_scalar_prefetch=0, grid=grid,
            in_specs=[pl.BlockSpec((None, L, Cin), lambda n, j: (n, 0, 0)),
                      pl.BlockSpec((9, Cin, tc), lambda n, j: (0, 0, j)),
                      pl.BlockSpec((1, tc), lambda n, j: (0, j))],
            out_specs=pl.BlockSpec((None, M, tc), lambda n, j: (n, 0, j))),
        compiler_params=pltpu.CompilerParams(
            dimension_semantics=("parallel", "parallel")),
        cost_estimate=pl.CostEstimate(
            flops=2 * N * M * 9 * Cin * Cout, transcendentals=0,
            bytes_accessed=slab.size * 2 + w9.size * 2 + N * M * Cout * 2),
    )(slab, w9, bias.reshape(1, Cout))
    return out.reshape(N, Ho, Wb, Cout)[:, :, :Wo, :]


# ----------------------------------------------------------------------------
# Pooling kernels
# ----------------------------------------------------------------------------

def _make_pool_kernel(starts, M):
    def kernel(x_ref, o_ref):
        m = x_ref[starts[0]:starts[0] + M, :]
        for st in starts[1:]:
            m = jnp.maximum(m, x_ref[st:st + M, :])
        o_ref[...] = m
    return kernel


def maxpool_3x3_s2(x):
    N, H, W, C = x.shape
    slab, starts, Ho, Wo, Wb = _build_slab(x, 3, 2, 1, float("-inf"))
    L = slab.shape[1]
    M = Ho * Wb
    out = pl.pallas_call(
        _make_pool_kernel(starts, M),
        out_shape=jax.ShapeDtypeStruct((N, M, C), x.dtype),
        grid_spec=pltpu.PrefetchScalarGridSpec(
            num_scalar_prefetch=0, grid=(N,),
            in_specs=[pl.BlockSpec((None, L, C), lambda n: (n, 0, 0))],
            out_specs=pl.BlockSpec((None, M, C), lambda n: (n, 0, 0))),
        compiler_params=pltpu.CompilerParams(dimension_semantics=("parallel",)),
    )(slab)
    return out.reshape(N, Ho, Wb, C)[:, :, :Wo, :]


def _avgpool_kernel(x_ref, o_ref):
    o_ref[...] = jnp.mean(x_ref[...].astype(jnp.float32), axis=0, keepdims=True)


def global_avgpool(x):
    N, H, W, C = x.shape
    xr = x.reshape(N, H * W, C)
    return pl.pallas_call(
        _avgpool_kernel,
        out_shape=jax.ShapeDtypeStruct((N, C), jnp.float32),
        grid_spec=pltpu.PrefetchScalarGridSpec(
            num_scalar_prefetch=0, grid=(N,),
            in_specs=[pl.BlockSpec((None, H * W, C), lambda n: (n, 0, 0))],
            out_specs=pl.BlockSpec((1, C), lambda n: (n, 0))),
        compiler_params=pltpu.CompilerParams(dimension_semantics=("parallel",)),
    )(xr)


# ----------------------------------------------------------------------------
# Network glue (im2col only for the 7x7 stem), 1x1 convs via fused matmul.
# ----------------------------------------------------------------------------

def extract_patches(x, kh, kw, stride, pad, pad_value=0.0):
    N, H, W, C = x.shape
    xp = jnp.pad(x, ((0, 0), (pad, pad), (pad, pad), (0, 0)),
                 constant_values=pad_value)
    Ho = (H + 2 * pad - kh) // stride + 1
    Wo = (W + 2 * pad - kw) // stride + 1
    cols = []
    for i in range(kh):
        for j in range(kw):
            cols.append(xp[:, i:i + stride * Ho:stride,
                           j:j + stride * Wo:stride, :])
    return jnp.stack(cols, axis=3), Ho, Wo  # (N, Ho, Wo, kh*kw, C)


def conv1x1(x, w, bias, stride=1, relu=True, residual=None):
    """x NHWC bf16, w (Cin, Cout) bf16 (BN folded), bias (Cout,) f32."""
    # TODO(synk): fold the stride-2 downsample slice into the matmul index_map.
    if stride != 1:
        x = x[:, ::stride, ::stride, :]
    N, H, W, C = x.shape
    Cout = w.shape[1]
    res = None if residual is None else residual.reshape(N * H * W, Cout)
    y = fused_matmul(x.reshape(N * H * W, C), w, bias, residual=res, relu=relu)
    return y.reshape(N, H, W, Cout)


def bottleneck_forward(x, p, stride):
    identity = x
    out = conv1x1(x, p["w1"], p["b1"], relu=True)
    out = conv3x3_bn_relu(out, p["w2"], p["b2"], stride=stride)
    if "wd" in p:
        identity = conv1x1(x, p["wd"], p["bd"], stride=stride, relu=False)
    # conv3 + bn + residual add + ReLU fused in one kernel
    return conv1x1(out, p["w3"], p["b3"], relu=True, residual=identity)


def detector_forward(params, x_nchw):
    """Equivalent of Detector.forward: resnet50 backbone + Linear(2048, 2)."""
    x = jnp.transpose(x_nchw, (0, 2, 3, 1)).astype(jnp.bfloat16)  # NCHW -> NHWC
    N = x.shape[0]
    # stem: 7x7/2 conv via small im2col (Cin=3 -> direct conv would starve MXU K)
    patches, Ho, Wo = extract_patches(x, 7, 7, 2, 3)
    a = patches.reshape(N * Ho * Wo, 7 * 7 * 3)
    x = fused_matmul(a, params["conv1_w"], params["conv1_b"],
                     relu=True).reshape(N, Ho, Wo, -1)
    x = maxpool_3x3_s2(x)
    for li, (width, blocks, stride0) in enumerate(LAYER_SPEC):
        for bi in range(blocks):
            stride = stride0 if bi == 0 else 1
            x = bottleneck_forward(x, params["layers"][li][bi], stride)
    feat = global_avgpool(x)                                   # (N, 2048) f32
    logits = fused_matmul(feat.astype(jnp.bfloat16), params["fc_w"],
                          params["fc_b"], relu=False, out_dtype=jnp.float32)
    return logits                                              # (N, 2)


# ----------------------------------------------------------------------------
# Deterministic parameter construction (BN folded into weights, bf16 weights,
# 64-wide channel dims zero-padded to 128 so activations stay lane-dense).
# ----------------------------------------------------------------------------

class ParamGen:
    def __init__(self, key):
        self.key = key
        self.count = 0

    def normal(self, shape, scale):
        self.count += 1
        k = jax.random.fold_in(self.key, self.count)
        return (scale * jax.random.normal(k, shape)).astype(jnp.float32)


def _pad_axis(a, axis, target):
    if a.shape[axis] == target:
        return a
    pads = [(0, 0)] * a.ndim
    pads[axis] = (0, target - a.shape[axis])
    return jnp.pad(a, pads)


def make_detector_params(key):
    pg = ParamGen(key)

    def conv_bn(cout, cin, k):
        fan_in = cin * k * k
        w = pg.normal((cout, cin, k, k), (2.0 / fan_in) ** 0.5)
        gamma = 1.0 + 0.1 * pg.normal((cout,), 1.0)
        beta = 0.1 * pg.normal((cout,), 1.0)
        mean = jnp.zeros((cout,), jnp.float32)
        var = jnp.ones((cout,), jnp.float32)
        scale = gamma / jnp.sqrt(var + 1e-5)
        bias = beta - mean * scale
        return w * scale[:, None, None, None], bias

    def to_1x1(w):                    # (cout, cin, 1, 1) -> (cin, cout)
        return jnp.transpose(w[:, :, 0, 0])

    def to_3x3(w):                    # (cout, cin, 3, 3) -> (9, cin, cout)
        return jnp.transpose(w, (2, 3, 1, 0)).reshape(9, w.shape[1], w.shape[0])

    params = {}
    w, b = conv_bn(64, 3, 7)
    w = jnp.transpose(w, (2, 3, 1, 0)).reshape(49 * 3, 64)
    params["conv1_w"] = _pad_axis(w, 1, CPAD).astype(jnp.bfloat16)
    params["conv1_b"] = _pad_axis(b, 0, CPAD)

    layers = []
    cin = 64            # logical channel count
    cin_act = CPAD      # physical (padded) channel count of the activation
    for width, blocks, stride in LAYER_SPEC:
        wp = max(width, CPAD)
        layer = []
        for bi in range(blocks):
            s = stride if bi == 0 else 1
            cout = width * 4
            blk = {}
            w, bb = conv_bn(width, cin, 1)
            blk["w1"] = _pad_axis(_pad_axis(to_1x1(w), 0, cin_act), 1, wp
                                  ).astype(jnp.bfloat16)
            blk["b1"] = _pad_axis(bb, 0, wp)
            w, bb = conv_bn(width, width, 3)
            blk["w2"] = _pad_axis(_pad_axis(to_3x3(w), 1, wp), 2, wp
                                  ).astype(jnp.bfloat16)
            blk["b2"] = _pad_axis(bb, 0, wp)
            w, bb = conv_bn(cout, width, 1)
            blk["w3"] = _pad_axis(to_1x1(w), 0, wp).astype(jnp.bfloat16)
            blk["b3"] = bb
            if s != 1 or cin != cout:
                w, bb = conv_bn(cout, cin, 1)
                blk["wd"] = _pad_axis(to_1x1(w), 0, cin_act).astype(jnp.bfloat16)
                blk["bd"] = bb
            layer.append(blk)
            cin = cout
            cin_act = cout            # >=256, already lane-dense
        layers.append(layer)
    params["layers"] = layers
    # self.net.fc = nn.Linear(2048, 2)
    params["fc_w"] = jnp.transpose(pg.normal((2, 2048), (1.0 / 2048) ** 0.5)
                                   ).astype(jnp.bfloat16)
    params["fc_b"] = jnp.zeros((2,), jnp.float32)
    return params


# ----------------------------------------------------------------------------
# Numerical self-check of the slab-based conv / pool kernels vs lax references.
# ----------------------------------------------------------------------------

def _self_check():
    key = jax.random.PRNGKey(42)
    cin, cout, hw = 128, 128, 10           # odd spatial -> exercises Wb padding
    for stride in (1, 2):
        kx, kw, kb = jax.random.split(jax.random.fold_in(key, stride), 3)
        x = jax.random.normal(kx, (2, hw, hw, cin)).astype(jnp.bfloat16)
        w9 = (jax.random.normal(kw, (9, cin, cout))
              * (2.0 / (9 * cin)) ** 0.5).astype(jnp.bfloat16)
        b = 0.1 * jax.random.normal(kb, (cout,))
        got = conv3x3_bn_relu(x, w9, b, stride).astype(jnp.float32)
        ref = jax.lax.conv_general_dilated(
            x.astype(jnp.float32),
            w9.reshape(3, 3, cin, cout).astype(jnp.float32),
            window_strides=(stride, stride), padding=[(1, 1), (1, 1)],
            dimension_numbers=("NHWC", "HWIO", "NHWC"),
            precision=jax.lax.Precision.HIGHEST)
        ref = jnp.maximum(ref + b, 0.0)
        assert got.shape == ref.shape, (got.shape, ref.shape)
        assert bool(jnp.allclose(got, ref, atol=0.1, rtol=0.05)), \
            f"conv3x3 stride={stride} mismatch"

    xm = jax.random.normal(jax.random.fold_in(key, 7),
                           (2, hw, hw, cin)).astype(jnp.bfloat16)
    got = maxpool_3x3_s2(xm).astype(jnp.float32)
    ref = jax.lax.reduce_window(
        xm.astype(jnp.float32), -jnp.inf, jax.lax.max,
        (1, 3, 3, 1), (1, 2, 2, 1), [(0, 0), (1, 1), (1, 1), (0, 0)])
    assert got.shape == ref.shape, (got.shape, ref.shape)
    assert bool(jnp.allclose(got, ref)), "maxpool mismatch"


# ----------------------------------------------------------------------------
# main
# ----------------------------------------------------------------------------

if __name__ == "__main__":
    _self_check()

    key = jax.random.PRNGKey(0)
    params = make_detector_params(key)

    # Small input consistent with the module: NCHW, 3 input channels.
    x = jax.random.normal(jax.random.fold_in(key, 999999), (2, 3, 64, 64),
                          dtype=jnp.float32)

    forward = jax.jit(detector_forward)
    out = forward(params, x)
    out = jax.block_until_ready(out)

    assert out.shape == (2, 2), out.shape
    assert out.dtype == jnp.float32
    assert bool(jnp.all(jnp.isfinite(out)))
    print("KERNEL_OK")
</pallas_src>

<mosaic_0001>
module attributes {stable_mosaic.version = 11 : i64} {
  func.func @kernel(%arg0: i32, %arg1: i32, %arg2: memref<1x208x128xbf16, #tpu.memory_space<vmem>>, %arg3: memref<9x128x128xbf16, #tpu.memory_space<vmem>>, %arg4: memref<1x128xf32, #tpu.memory_space<vmem>>, %arg5: memref<1x160x128xbf16, #tpu.memory_space<vmem>>) attributes {dimension_semantics = [#tpu.dimension_semantics<parallel>, #tpu.dimension_semantics<parallel>], iteration_bounds = array<i64: 2, 1>, scalar_prefetch = 0 : i64, scratch_operands = 0 : i64, tpu.core_type = #tpu.core_type<tc>, window_params = [{transform_indices = @transform_0, window_bounds = array<i64: 1, 208, 128>}, {transform_indices = @transform_1, window_bounds = array<i64: 9, 128, 128>}, {transform_indices = @transform_2, window_bounds = array<i64: 1, 128>}, {transform_indices = @transform_3, window_bounds = array<i64: 1, 160, 128>}]} {
    %c0 = arith.constant 0 : index
    %c0_0 = arith.constant 0 : index
    %c0_1 = arith.constant 0 : index
    %0 = vector.load %arg2[%c0, %c0_0, %c0_1] : memref<1x208x128xbf16, #tpu.memory_space<vmem>>, vector<1x160x128xbf16>
    %1 = vector.shape_cast %0 : vector<1x160x128xbf16> to vector<160x128xbf16>
    %c0_2 = arith.constant 0 : index
    %c0_3 = arith.constant 0 : index
    %c0_4 = arith.constant 0 : index
    %2 = vector.load %arg3[%c0_2, %c0_3, %c0_4] : memref<9x128x128xbf16, #tpu.memory_space<vmem>>, vector<1x128x128xbf16>
    %3 = vector.shape_cast %2 : vector<1x128x128xbf16> to vector<128x128xbf16>
    %cst = arith.constant dense<0.000000e+00> : vector<160x128xf32>
    %4 = tpu.matmul %1, %3, %cst {dimension_numbers = #tpu.dot_dimension_numbers<[1], [0], [0], [1], [0, 0, 1, 1], [], []>} : vector<160x128xbf16>, vector<128x128xbf16>, vector<160x128xf32> -> vector<160x128xf32>
    %c0_5 = arith.constant 0 : index
    %c1 = arith.constant 1 : index
    %c0_6 = arith.constant 0 : index
    %5 = vector.load %arg2[%c0_5, %c1, %c0_6] : memref<1x208x128xbf16, #tpu.memory_space<vmem>>, vector<1x160x128xbf16>
    %6 = vector.shape_cast %5 : vector<1x160x128xbf16> to vector<160x128xbf16>
    %c1_7 = arith.constant 1 : index
    %c0_8 = arith.constant 0 : index
    %c0_9 = arith.constant 0 : index
    %7 = vector.load %arg3[%c1_7, %c0_8, %c0_9] : memref<9x128x128xbf16, #tpu.memory_space<vmem>>, vector<1x128x128xbf16>
    %8 = vector.shape_cast %7 : vector<1x128x128xbf16> to vector<128x128xbf16>
    %cst_10 = arith.constant dense<0.000000e+00> : vector<160x128xf32>
    %9 = tpu.matmul %6, %8, %cst_10 {dimension_numbers = #tpu.dot_dimension_numbers<[1], [0], [0], [1], [0, 0, 1, 1], [], []>} : vector<160x128xbf16>, vector<128x128xbf16>, vector<160x128xf32> -> vector<160x128xf32>
    %10 = arith.addf %4, %9 : vector<160x128xf32>
    %c0_11 = arith.constant 0 : index
    %c2 = arith.constant 2 : index
    %c0_12 = arith.constant 0 : index
    %11 = vector.load %arg2[%c0_11, %c2, %c0_12] : memref<1x208x128xbf16, #tpu.memory_space<vmem>>, vector<1x160x128xbf16>
    %12 = vector.shape_cast %11 : vector<1x160x128xbf16> to vector<160x128xbf16>
    %c2_13 = arith.constant 2 : index
    %c0_14 = arith.constant 0 : index
    %c0_15 = arith.constant 0 : index
    %13 = vector.load %arg3[%c2_13, %c0_14, %c0_15] : memref<9x128x128xbf16, #tpu.memory_space<vmem>>, vector<1x128x128xbf16>
    %14 = vector.shape_cast %13 : vector<1x128x128xbf16> to vector<128x128xbf16>
    %cst_16 = arith.constant dense<0.000000e+00> : vector<160x128xf32>
    %15 = tpu.matmul %12, %14, %cst_16 {dimension_numbers = #tpu.dot_dimension_numbers<[1], [0], [0], [1], [0, 0, 1, 1], [], []>} : vector<160x128xbf16>, vector<128x128xbf16>, vector<160x128xf32> -> vector<160x128xf32>
    %16 = arith.addf %10, %15 : vector<160x128xf32>
    %c0_17 = arith.constant 0 : index
    %c16 = arith.constant 16 : index
    %c0_18 = arith.constant 0 : index
    %17 = vector.load %arg2[%c0_17, %c16, %c0_18] : memref<1x208x128xbf16, #tpu.memory_space<vmem>>, vector<1x160x128xbf16>
    %18 = vector.shape_cast %17 : vector<1x160x128xbf16> to vector<160x128xbf16>
    %c3 = arith.constant 3 : index
    %c0_19 = arith.constant 0 : index
    %c0_20 = arith.constant 0 : index
    %19 = vector.load %arg3[%c3, %c0_19, %c0_20] : memref<9x128x128xbf16, #tpu.memory_space<vmem>>, vector<1x128x128xbf16>
    %20 = vector.shape_cast %19 : vector<1x128x128xbf16> to vector<128x128xbf16>
    %cst_21 = arith.constant dense<0.000000e+00> : vector<160x128xf32>
    %21 = tpu.matmul %18, %20, %cst_21 {dimension_numbers = #tpu.dot_dimension_numbers<[1], [0], [0], [1], [0, 0, 1, 1], [], []>} : vector<160x128xbf16>, vector<128x128xbf16>, vector<160x128xf32> -> vector<160x128xf32>
    %22 = arith.addf %16, %21 : vector<160x128xf32>
    %c0_22 = arith.constant 0 : index
    %c17 = arith.constant 17 : index
    %c0_23 = arith.constant 0 : index
    %23 = vector.load %arg2[%c0_22, %c17, %c0_23] : memref<1x208x128xbf16, #tpu.memory_space<vmem>>, vector<1x160x128xbf16>
    %24 = vector.shape_cast %23 : vector<1x160x128xbf16> to vector<160x128xbf16>
    %c4 = arith.constant 4 : index
    %c0_24 = arith.constant 0 : index
    %c0_25 = arith.constant 0 : index
    %25 = vector.load %arg3[%c4, %c0_24, %c0_25] : memref<9x128x128xbf16, #tpu.memory_space<vmem>>, vector<1x128x128xbf16>
    %26 = vector.shape_cast %25 : vector<1x128x128xbf16> to vector<128x128xbf16>
    %cst_26 = arith.constant dense<0.000000e+00> : vector<160x128xf32>
    %27 = tpu.matmul %24, %26, %cst_26 {dimension_numbers = #tpu.dot_dimension_numbers<[1], [0], [0], [1], [0, 0, 1, 1], [], []>} : vector<160x128xbf16>, vector<128x128xbf16>, vector<160x128xf32> -> vector<160x128xf32>
    %28 = arith.addf %22, %27 : vector<160x128xf32>
    %c0_27 = arith.constant 0 : index
    %c18 = arith.constant 18 : index
    %c0_28 = arith.constant 0 : index
    %29 = vector.load %arg2[%c0_27, %c18, %c0_28] : memref<1x208x128xbf16, #tpu.memory_space<vmem>>, vector<1x160x128xbf16>
    %30 = vector.shape_cast %29 : vector<1x160x128xbf16> to vector<160x128xbf16>
    %c5 = arith.constant 5 : index
    %c0_29 = arith.constant 0 : index
    %c0_30 = arith.constant 0 : index
    %31 = vector.load %arg3[%c5, %c0_29, %c0_30] : memref<9x128x128xbf16, #tpu.memory_space<vmem>>, vector<1x128x128xbf16>
    %32 = vector.shape_cast %31 : vector<1x128x128xbf16> to vector<128x128xbf16>
    %cst_31 = arith.constant dense<0.000000e+00> : vector<160x128xf32>
    %33 = tpu.matmul %30, %32, %cst_31 {dimension_numbers = #tpu.dot_dimension_numbers<[1], [0], [0], [1], [0, 0, 1, 1], [], []>} : vector<160x128xbf16>, vector<128x128xbf16>, vector<160x128xf32> -> vector<160x128xf32>
    %34 = arith.addf %28, %33 : vector<160x128xf32>
    %c0_32 = arith.constant 0 : index
    %c32 = arith.constant 32 : index
    %c0_33 = arith.constant 0 : index
    %35 = vector.load %arg2[%c0_32, %c32, %c0_33] : memref<1x208x128xbf16, #tpu.memory_space<vmem>>, vector<1x160x128xbf16>
    %36 = vector.shape_cast %35 : vector<1x160x128xbf16> to vector<160x128xbf16>
    %c6 = arith.constant 6 : index
    %c0_34 = arith.constant 0 : index
    %c0_35 = arith.constant 0 : index
    %37 = vector.load %arg3[%c6, %c0_34, %c0_35] : memref<9x128x128xbf16, #tpu.memory_space<vmem>>, vector<1x128x128xbf16>
    %38 = vector.shape_cast %37 : vector<1x128x128xbf16> to vector<128x128xbf16>
    %cst_36 = arith.constant dense<0.000000e+00> : vector<160x128xf32>
    %39 = tpu.matmul %36, %38, %cst_36 {dimension_numbers = #tpu.dot_dimension_numbers<[1], [0], [0], [1], [0, 0, 1, 1], [], []>} : vector<160x128xbf16>, vector<128x128xbf16>, vector<160x128xf32> -> vector<160x128xf32>
    %40 = arith.addf %34, %39 : vector<160x128xf32>
    %c0_37 = arith.constant 0 : index
    %c33 = arith.constant 33 : index
    %c0_38 = arith.constant 0 : index
    %41 = vector.load %arg2[%c0_37, %c33, %c0_38] : memref<1x208x128xbf16, #tpu.memory_space<vmem>>, vector<1x160x128xbf16>
    %42 = vector.shape_cast %41 : vector<1x160x128xbf16> to vector<160x128xbf16>
    %c7 = arith.constant 7 : index
    %c0_39 = arith.constant 0 : index
    %c0_40 = arith.constant 0 : index
    %43 = vector.load %arg3[%c7, %c0_39, %c0_40] : memref<9x128x128xbf16, #tpu.memory_space<vmem>>, vector<1x128x128xbf16>
    %44 = vector.shape_cast %43 : vector<1x128x128xbf16> to vector<128x128xbf16>
    %cst_41 = arith.constant dense<0.000000e+00> : vector<160x128xf32>
    %45 = tpu.matmul %42, %44, %cst_41 {dimension_numbers = #tpu.dot_dimension_numbers<[1], [0], [0], [1], [0, 0, 1, 1], [], []>} : vector<160x128xbf16>, vector<128x128xbf16>, vector<160x128xf32> -> vector<160x128xf32>
    %46 = arith.addf %40, %45 : vector<160x128xf32>
    %c0_42 = arith.constant 0 : index
    %c34 = arith.constant 34 : index
    %c0_43 = arith.constant 0 : index
    %47 = vector.load %arg2[%c0_42, %c34, %c0_43] : memref<1x208x128xbf16, #tpu.memory_space<vmem>>, vector<1x160x128xbf16>
    %48 = vector.shape_cast %47 : vector<1x160x128xbf16> to vector<160x128xbf16>
    %c8 = arith.constant 8 : index
    %c0_44 = arith.constant 0 : index
    %c0_45 = arith.constant 0 : index
    %49 = vector.load %arg3[%c8, %c0_44, %c0_45] : memref<9x128x128xbf16, #tpu.memory_space<vmem>>, vector<1x128x128xbf16>
    %50 = vector.shape_cast %49 : vector<1x128x128xbf16> to vector<128x128xbf16>
    %cst_46 = arith.constant dense<0.000000e+00> : vector<160x128xf32>
    %51 = tpu.matmul %48, %50, %cst_46 {dimension_numbers = #tpu.dot_dimension_numbers<[1], [0], [0], [1], [0, 0, 1, 1], [], []>} : vector<160x128xbf16>, vector<128x128xbf16>, vector<160x128xf32> -> vector<160x128xf32>
    %52 = arith.addf %46, %51 : vector<160x128xf32>
    %c0_47 = arith.constant 0 : index
    %c0_48 = arith.constant 0 : index
    %53 = vector.load %arg4[%c0_47, %c0_48] : memref<1x128xf32, #tpu.memory_space<vmem>>, vector<1x128xf32>
    %54 = vector.broadcast %53 : vector<1x128xf32> to vector<160x128xf32>
    %55 = arith.addf %52, %54 : vector<160x128xf32>
    %cst_49 = arith.constant 0.000000e+00 : f32
    %56 = vector.broadcast %cst_49 : f32 to vector<160x128xf32>
    %57 = arith.maximumf %55, %56 : vector<160x128xf32>
    %58 = arith.truncf %57 : vector<160x128xf32> to vector<160x128xbf16>
    %c0_50 = arith.constant 0 : index
    %c0_51 = arith.constant 0 : index
    %c0_52 = arith.constant 0 : index
    %59 = vector.load %arg5[%c0_50, %c0_51, %c0_52] : memref<1x160x128xbf16, #tpu.memory_space<vmem>>, vector<1x160x128xbf16>
    %60 = vector.shape_cast %59 : vector<1x160x128xbf16> to vector<160x128xbf16>
    %61 = vector.shape_cast %58 : vector<160x128xbf16> to vector<1x160x128xbf16>
    tpu.vector_store %arg5[%c0_50, %c0_51, %c0_52], %61 {strides = array<i32>} : memref<1x160x128xbf16, #tpu.memory_space<vmem>>, vector<1x160x128xbf16>,
    return
  }
  func.func @transform_0(%arg0: i32, %arg1: i32) -> (i32, i32, i32) {
    %c0_i32 = arith.constant 0 : i32
    %c0_i32_0 = arith.constant 0 : i32
    %c0_i32_1 = arith.constant 0 : i32
    return %arg0, %c0_i32, %c0_i32_0 : i32, i32, i32
  }
  func.func @transform_1(%arg0: i32, %arg1: i32) -> (i32, i32, i32) {
    %c0_i32 = arith.constant 0 : i32
    %c0_i32_0 = arith.constant 0 : i32
    %c0_i32_1 = arith.constant 0 : i32
    return %c0_i32, %c0_i32_0, %arg1 : i32, i32, i32
  }
  func.func @transform_2(%arg0: i32, %arg1: i32) -> (i32, i32) {
    %c0_i32 = arith.constant 0 : i32
    %c0_i32_0 = arith.constant 0 : i32
    return %c0_i32, %arg1 : i32, i32
  }
  func.func @transform_3(%arg0: i32, %arg1: i32) -> (i32, i32, i32) {
    %c0_i32 = arith.constant 0 : i32
    %c0_i32_0 = arith.constant 0 : i32
    return %arg0, %c0_i32, %arg1 : i32, i32, i32
  }
}

</mosaic_0001>

<llo_original>
// kernel: tpu_custom_call.1
$region0: #{tpu_custom_call.1}
  #allocation0 [shape = 'u32[]', space=smem, size = 0x4, offset = 0x4, fixed_abs, tag = 'smem constant byte address 0x4 - core index']
  #allocation1 [shape = 'u32[144,128]{1,0:T(1,128)}', space=vmem, size = 0x12000, scoped, tag = 'internal scratch']
  %s0 = inlined_call_operand.hbm [shape: bf16[2,208,128], index: 0, kind: input, shape index: {}]
  %s1 = inlined_call_operand.hbm [shape: bf16[9,128,128], index: 1, kind: input, shape index: {}]
  %s2 = inlined_call_operand.vmem [shape: f32[1,128], index: 2, kind: input, shape index: {}]
  %s3 = inlined_call_operand.hbm [shape: bf16[2,160,128], index: 3, kind: output, shape index: {}]
  %s4 = sld [smem:[#allocation0]]
  $region53: #{tpu_custom_call.1} parent=0
    _
  %s6 = ssub.s32 1, %s4
  %s7 = scalar_select 0, %s6, %s4
  $region1: #{tpu_custom_call.1} parent=0
    #allocation2 [shape = 'u8[106496]{0}', space=vmem, size = 0x1a000, scoped, tag = 'input window, operand 0']
    #allocation3 [shape = 's32[2]{0}', space=sflag, size = 0x8, scoped, tag = 'scoped memory for tpu_custom_call.1']
    #allocation4 [shape = 's32[2]{0}', space=sflag, size = 0x8, scoped, tag = 'scoped memory for tpu_custom_call.1']
    #allocation5 [shape = 'u8[294912]{0}', space=vmem, size = 0x48000, scoped, tag = 'input window, operand 1, single buffered']
    #allocation6 [shape = 's32[1]{0}', space=sflag, size = 0x4, scoped, tag = 'scoped memory for tpu_custom_call.1']
    #allocation7 [shape = 'u8[81920]{0}', space=vmem, size = 0x14000, scoped, tag = 'output window, operand 0']
    %8 = vsyncpa [#allocation3], 0
    %s9 = scalar_lea.sflag [#allocation3], 1
    %10 = vsyncpa %s9, 0
    %11 = vsyncpa [#allocation6], 0
    %12 = vsyncpa [#allocation4], 0
    %s13 = scalar_lea.sflag [#allocation4], 1
    %14 = vsyncpa %s13, 0
    loop: start=0, step=1, limit=4
    $region2: #{tpu_custom_call.1} parent=1 // loop_pre_header
      _
    $region3: #{tpu_custom_call.1} parent=1 // loop_header
      %s16 = sphi 0, %s20
      %p17 = scmp.ge.s32.totalorder %s16, 4
      %s23 = sphi 0, %s35
      %s24 = sphi 0, %s31
      %s25 = sphi 0, %s23
      %s26 = sphi 0, %s24
      %s27 = sphi 0, %s25
      %s28 = sphi 0, %s26
      %s38 = sphi 0, %s40
      %s41 = sphi 0, %s38
      %s42 = sphi 0, %s41
      %s58 = sphi 0, %s42
      %s64 = sphi 0, %s66
      %s67 = sphi 0, %s64
      %s68 = sphi 0, %s67
      %s84 = sphi 0, %s68
      %s90 = sphi 0, %s92
      %s93 = sphi 0, %s90
      %s94 = sphi 0, %s93
      %s110 = sphi 0, %s94
      %s118 = sphi 0, %s120
      %s121 = sphi 0, %s118
      %s122 = sphi 0, %s121
      %s138 = sphi 0, %s122
    $region4: #{tpu_custom_call.1} parent=1 // loop_header_branch
      %19 = sbr.rel (%p17) target = $region8
    $region5: #{tpu_custom_call.1} parent=1 // loop_body
      %s21 = ssub.s32 %s16, 1
      %s22 = ssub.s32 %s16, 2
      %s29 = sadd.s32 1, %s24
      %p30 = scmp.ge.s32.totalorder %s29, 1
      %s31 = scalar_select %p30, 0, %s29
      %s32 = sadd.s32 1, %s23
      %s33 = scalar_select %p30, %s32, %s23
      %p34 = scmp.ge.s32.totalorder %s33, 2
      %s35 = scalar_select %p34, 0, %s33
      %s36 = ssub.s32 %s23, %s35
      %p37 = scmp.eq.s32.totalorder %s36, 0
      %s39 = sadd.s32 %s38, 1
      %s40 = scalar_select %p37, %s38, %s39
      %p43 = pneg %p37
      %p44 = scmp.eq.s32.totalorder %s16, 1
      %p45 = por %p43, %p44
      %p46 = scmp.ne.s32.totalorder %s38, %s41
      %p47 = scmp.eq.s32.totalorder %s16, 0
      %p48 = por %p46, %p47
      %p49 = scmp.ne.s32.totalorder %s38, %s41
      %p50 = scmp.eq.s32.totalorder %s21, 1
      %p51 = por %p49, %p50
      %p52 = scmp.ne.s32.totalorder %s41, %s42
      %p53 = scmp.eq.s32.totalorder %s21, 0
      %p54 = por %p52, %p53
      %p55 = scmp.ne.s32.totalorder %s41, %s42
      %p56 = scmp.eq.s32.totalorder %s22, 1
      %p57 = por %p55, %p56
      %p59 = scmp.ne.s32.totalorder %s42, %s58
      %p60 = scmp.eq.s32.totalorder %s22, 0
      %p61 = por %p59, %p60
      %s62 = ssub.s32 %s24, %s31
      %p63 = scmp.eq.s32.totalorder %s62, 0
      %s65 = sadd.s32 %s64, 1
      %s66 = scalar_select %p63, %s64, %s65
      %p69 = pneg %p63
      %p70 = scmp.eq.s32.totalorder %s16, 1
      %p71 = por %p69, %p70
      %p72 = scmp.ne.s32.totalorder %s64, %s67
      %p73 = scmp.eq.s32.totalorder %s16, 0
      %p74 = por %p72, %p73
      %p75 = scmp.ne.s32.totalorder %s64, %s67
      %p76 = scmp.eq.s32.totalorder %s21, 1
      %p77 = por %p75, %p76
      %p78 = scmp.ne.s32.totalorder %s67, %s68
      %p79 = scmp.eq.s32.totalorder %s21, 0
      %p80 = por %p78, %p79
      %p81 = scmp.ne.s32.totalorder %s67, %s68
      %p82 = scmp.eq.s32.totalorder %s22, 1
      %p83 = por %p81, %p82
      %p85 = scmp.ne.s32.totalorder %s68, %s84
      %p86 = scmp.eq.s32.totalorder %s22, 0
      %p87 = por %p85, %p86
      %s88 = ssub.s32 %s24, %s31
      %p89 = scmp.eq.s32.totalorder %s88, 0
      %s91 = sadd.s32 %s90, 1
      %s92 = scalar_select %p89, %s90, %s91
      %p95 = pneg %p89
      %p96 = scmp.eq.s32.totalorder %s16, 1
      %p97 = por %p95, %p96
      %p98 = scmp.ne.s32.totalorder %s90, %s93
      %p99 = scmp.eq.s32.totalorder %s16, 0
      %p100 = por %p98, %p99
      %p101 = scmp.ne.s32.totalorder %s90, %s93
      %p102 = scmp.eq.s32.totalorder %s21, 1
      %p103 = por %p101, %p102
      %p104 = scmp.ne.s32.totalorder %s93, %s94
      %p105 = scmp.eq.s32.totalorder %s21, 0
      %p106 = por %p104, %p105
      %p107 = scmp.ne.s32.totalorder %s93, %s94
      %p108 = scmp.eq.s32.totalorder %s22, 1
      %p109 = por %p107, %p108
      %p111 = scmp.ne.s32.totalorder %s94, %s110
      %p112 = scmp.eq.s32.totalorder %s22, 0
      %p113 = por %p111, %p112
      %s114 = ssub.s32 %s23, %s35
      %s115 = ssub.s32 %s24, %s31
      %s116 = sor.u32 %s114, %s115
      %p117 = scmp.eq.s32.totalorder %s116, 0
      %s119 = sadd.s32 %s118, 1
      %s120 = scalar_select %p117, %s118, %s119
      %p123 = pneg %p117
      %p124 = scmp.eq.s32.totalorder %s16, 1
      %p125 = por %p123, %p124
      %p126 = scmp.ne.s32.totalorder %s118, %s121
      %p127 = scmp.eq.s32.totalorder %s16, 0
      %p128 = por %p126, %p127
      %p129 = scmp.ne.s32.totalorder %s118, %s121
      %p130 = scmp.eq.s32.totalorder %s21, 1
      %p131 = por %p129, %p130
      %p132 = scmp.ne.s32.totalorder %s121, %s122
      %p133 = scmp.eq.s32.totalorder %s21, 0
      %p134 = por %p132, %p133
      %p135 = scmp.ne.s32.totalorder %s121, %s122
      %p136 = scmp.eq.s32.totalorder %s22, 1
      %p137 = por %p135, %p136
      %p139 = scmp.ne.s32.totalorder %s122, %s138
      %p140 = scmp.eq.s32.totalorder %s22, 0
      %p141 = por %p139, %p140
      %p142 = scmp.le.s32.totalorder 1, %s16
      %p143 = scmp.lt.s32.totalorder %s16, 3
      %p144 = pnand %p142, %p143
      %p145 = pneg %p144
      // Predicated region
      $region9: #{tpu_custom_call.1} parent=5 // pred_check
        _
      $region10: #{tpu_custom_call.1} parent=5 // pred_check_branch
        %147 = sbr.rel (%p144) target = $region12
      $region11: #{tpu_custom_call.1} parent=5 // pred_region
        %s148 = ssub.s32 %s16, 1
        // Predicated region
        $region13: #{tpu_custom_call.1} parent=11 // pred_check
          %p149 = pneg %p80
        $region14: #{tpu_custom_call.1} parent=11 // pred_check_branch
          %151 = sbr.rel (%p149) target = $region16
        $region15: #{tpu_custom_call.1} parent=11 // pred_region
          %s153 = ssub.s32 9216, 9216
          %154 = vsyncadd [#allocation6], %s153
          %s155 = smul.addr %s26, 64
          %s156 = scalar_lea.hbm %s1, %s155
          %s157 = sshll.u32 [#allocation5], 4
          %s158 = int_to_ptr.vmem [resolvable:$true] %s157
          %163 = dma.hbm_to_vmem [thread:$0]  %s156, 9216, %s158, [#allocation6], 64, 64, 4
        $region16: #{tpu_custom_call.1} parent=11 // pred_fallthru
          _
        // Predicated region
        $region17: #{tpu_custom_call.1} parent=11 // pred_check
          %p164 = pneg %p106
        $region18: #{tpu_custom_call.1} parent=11 // pred_check_branch
          %166 = sbr.rel (%p164) target = $region20
        $region19: #{tpu_custom_call.1} parent=11 // pred_region
          %p167 = scmp.lt.s32.totalorder %s26, 0
          %s168 = scalar_select %p167, %s26, 0
          %s169 = scalar_lea.vmem %s2, %s168
        $region20: #{tpu_custom_call.1} parent=11 // pred_fallthru
          _
      $region12: #{tpu_custom_call.1} parent=5 // pred_fallthru
        _
      %p170 = scmp.lt.s32.totalorder %s16, 2
      // Predicated region
      $region21: #{tpu_custom_call.1} parent=5 // pred_check
        %p171 = pneg %p170
      $region22: #{tpu_custom_call.1} parent=5 // pred_check_branch
        %173 = sbr.rel (%p171) target = $region24
      $region23: #{tpu_custom_call.1} parent=5 // pred_region
        // Predicated region
        $region25: #{tpu_custom_call.1} parent=23 // pred_check
          %p174 = pneg %p48
        $region26: #{tpu_custom_call.1} parent=23 // pred_check_branch
          %176 = sbr.rel (%p174) target = $region28
        $region27: #{tpu_custom_call.1} parent=23 // pred_region
          %s177 = sand.u32 %s38, 1
          %s178 = scalar_lea.sflag [#allocation3], %s177
          %s179 = sand.u32 %s38, 1
          %s180 = smul.addr %s179, 104
          %s181 = scalar_lea.vmem [#allocation2], %s180
          %s183 = ssub.s32 1664, 1664
          %184 = vsyncadd %s178, %s183
          %s185 = smul.addr %s23, 26
          %s186 = smul.addr %s185, 64
          %s187 = scalar_lea.hbm %s0, %s186
          %s188 = sshll.u32 %s181, 4
          %s189 = int_to_ptr.vmem [resolvable:$true] %s188
          %194 = dma.hbm_to_vmem [thread:$0]  %s187, 1664, %s189, %s178, 64, 64, 4
        $region28: #{tpu_custom_call.1} parent=23 // pred_fallthru
          _
      $region24: #{tpu_custom_call.1} parent=5 // pred_fallthru
        _
      %p195 = scmp.le.s32.totalorder 1, %s16
      %p196 = scmp.lt.s32.totalorder %s16, 3
      %p197 = pnand %p195, %p196
      %p198 = pneg %p197
      // Predicated region
      $region29: #{tpu_custom_call.1} parent=5 // pred_check
        _
      $region30: #{tpu_custom_call.1} parent=5 // pred_check_branch
        %200 = sbr.rel (%p197) target = $region32
      $region31: #{tpu_custom_call.1} parent=5 // pred_region
        %s201 = ssub.s32 %s16, 1
        %s202 = sand.u32 %s41, 1
        %s203 = scalar_lea.sflag [#allocation3], %s202
        %s204 = sand.u32 %s41, 1
        %s205 = smul.addr %s204, 104
        %s206 = scalar_lea.vmem [#allocation2], %s205
        // Predicated region
        $region33: #{tpu_custom_call.1} parent=31 // pred_check
          %p207 = pneg %p54
        $region34: #{tpu_custom_call.1} parent=31 // pred_check_branch
          %209 = sbr.rel (%p207) target = $region36
        $region35: #{tpu_custom_call.1} parent=31 // pred_region
          %210 = dma.done %s203, 1664
        $region36: #{tpu_custom_call.1} parent=31 // pred_fallthru
          _
        // Predicated region
        $region37: #{tpu_custom_call.1} parent=31 // pred_check
          %p211 = pneg %p80
        $region38: #{tpu_custom_call.1} parent=31 // pred_check_branch
          %213 = sbr.rel (%p211) target = $region40
        $region39: #{tpu_custom_call.1} parent=31 // pred_region
          %214 = dma.done [#allocation6], 9216
        $region40: #{tpu_custom_call.1} parent=31 // pred_fallthru
          _
        %s215 = sand.u32 %s41, 1
        %s216 = scalar_lea.sflag [#allocation3], %s215
        %s217 = sand.u32 %s41, 1
        %s218 = smul.addr %s217, 104
        %s219 = scalar_lea.vmem [#allocation2], %s218
        %p220 = pneg %p54
        %p221 = pneg %p51
        %p222 = pneg %p80
        %p223 = pneg %p77
        %p224 = scmp.lt.s32.totalorder %s26, 0
        %s225 = scalar_select %p224, %s26, 0
        %s226 = scalar_lea.vmem %s2, %s225
        %p227 = pneg %p106
        %p228 = pneg %p103
        %p229 = pneg %p134
        %p230 = pneg %p131
        %s231 = sand.u32 %s121, 1
        %s232 = scalar_lea.sflag [#allocation4], %s231
        %s233 = sand.u32 %s121, 1
        %s234 = smul.addr %s233, 80
        %s235 = scalar_lea.vmem [#allocation7], %s234
        %p236 = scmp.lt.s32.totalorder %s26, 0
        %s237 = scalar_select %p236, %s26, 0
        %s238 = scalar_lea.vmem %s2, %s237
        %v240 = vld [vmem:[%s206] sm:$0xf]
        %v241 = vld [vmem:[%s206 + $0x4] sm:$0xf]
        %v242 = vld [vmem:[%s206 + $0x8] sm:$0xf]
        %v243 = vld [vmem:[%s206 + $0xc] sm:$0xf]
        %v244 = vld [vmem:[%s206 + $0x10] sm:$0xf]
        %v245 = vld [vmem:[%s206 + $0x14] sm:$0xf]
        %v246 = vld [vmem:[%s206 + $0x18] sm:$0xf]
        %v247 = vld [vmem:[%s206 + $0x1c] sm:$0xf]
        %v248 = vld [vmem:[%s206 + $0x20] sm:$0xf]
        %v249 = vld [vmem:[%s206 + $0x24] sm:$0xf]
        %v250 = vld [vmem:[%s206 + $0x28] sm:$0xf]
        %v251 = vld [vmem:[%s206 + $0x2c] sm:$0xf]
        %v252 = vld [vmem:[%s206 + $0x30] sm:$0xf]
        %v253 = vld [vmem:[%s206 + $0x34] sm:$0xf]
        %v254 = vld [vmem:[%s206 + $0x38] sm:$0xf]
        %v255 = vld [vmem:[%s206 + $0x3c] sm:$0xf]
        %v256 = vld [vmem:[%s206 + $0x40] sm:$0xf]
        %v257 = vld [vmem:[%s206 + $0x44] sm:$0xf]
        %v258 = vld [vmem:[%s206 + $0x48] sm:$0xf]
        %v259 = vld [vmem:[%s206 + $0x4c] sm:$0xf]
        %v260 = vld [vmem:[#allocation5] sm:$0xf]
        %v261 = vld [vmem:[#allocation5 + $0x4] sm:$0xf]
        %v262 = vld [vmem:[#allocation5 + $0x8] sm:$0xf]
        %v263 = vld [vmem:[#allocation5 + $0xc] sm:$0xf]
        %v264 = vld [vmem:[#allocation5 + $0x10] sm:$0xf]
        %v265 = vld [vmem:[#allocation5 + $0x14] sm:$0xf]
        %v266 = vld [vmem:[#allocation5 + $0x18] sm:$0xf]
        %v267 = vld [vmem:[#allocation5 + $0x1c] sm:$0xf]
        %v268 = vld [vmem:[#allocation5 + $0x20] sm:$0xf]
        %v269 = vld [vmem:[#allocation5 + $0x24] sm:$0xf]
        %v270 = vld [vmem:[#allocation5 + $0x28] sm:$0xf]
        %v271 = vld [vmem:[#allocation5 + $0x2c] sm:$0xf]
        %v272 = vld [vmem:[#allocation5 + $0x30] sm:$0xf]
        %v273 = vld [vmem:[#allocation5 + $0x34] sm:$0xf]
        %v274 = vld [vmem:[#allocation5 + $0x38] sm:$0xf]
        %v275 = vld [vmem:[#allocation5 + $0x3c] sm:$0xf]
        %v276 = vld [vmem:[%s206 + $0x50] sm:$0x1]
        %s277 = scalar_lea.vmem [#allocation5], 64
        %v278 = vld [vmem:[%s277] sm:$0xf]
        %v279 = vld [vmem:[%s277 + $0x4] sm:$0xf]
        %v280 = vld [vmem:[%s277 + $0x8] sm:$0xf]
        %v281 = vld [vmem:[%s277 + $0xc] sm:$0xf]
        %v282 = vld [vmem:[%s277 + $0x10] sm:$0xf]
        %v283 = vld [vmem:[%s277 + $0x14] sm:$0xf]
        %v284 = vld [vmem:[%s277 + $0x18] sm:$0xf]
        %v285 = vld [vmem:[%s277 + $0x1c] sm:$0xf]
        %v286 = vld [vmem:[%s277 + $0x20] sm:$0xf]
        %v287 = vld [vmem:[%s277 + $0x24] sm:$0xf]
        %v288 = vld [vmem:[%s277 + $0x28] sm:$0xf]
        %v289 = vld [vmem:[%s277 + $0x2c] sm:$0xf]
        %v290 = vld [vmem:[%s277 + $0x30] sm:$0xf]
        %v291 = vld [vmem:[%s277 + $0x34] sm:$0xf]
        %v292 = vld [vmem:[%s277 + $0x38] sm:$0xf]
        %v293 = vld [vmem:[%s277 + $0x3c] sm:$0xf]
        %v315 = vunpack.c.l.b16 %v240
        %v316 = vunpack.c.l.b16 %v241
        %v317 = vunpack.c.l.b16 %v242
        %v318 = vunpack.c.l.b16 %v243
        %v319 = vunpack.c.l.b16 %v244
        %v320 = vunpack.c.l.b16 %v245
        %v321 = vunpack.c.l.b16 %v246
        %v322 = vunpack.c.l.b16 %v247
        %v323 = vunpack.c.l.b16 %v248
        %v324 = vunpack.c.l.b16 %v249
        %v325 = vunpack.c.l.b16 %v250
        %v326 = vunpack.c.l.b16 %v251
        %v327 = vunpack.c.l.b16 %v252
        %v328 = vunpack.c.l.b16 %v253
        %v329 = vunpack.c.l.b16 %v254
        %v330 = vunpack.c.l.b16 %v255
        %v331 = vunpack.c.l.b16 %v256
        %v332 = vunpack.c.l.b16 %v257
        %v333 = vunpack.c.l.b16 %v258
        %v334 = vunpack.c.l.b16 %v259
        %v335 = vunpack.c.l.b16 %v276
        %v336 = vpack.c.b16 %v316, %v315
        %v337 = vpack.c.b16 %v318, %v317
        %v338 = vpack.c.b16 %v320, %v319
        %v339 = vpack.c.b16 %v322, %v321
        %v340 = vpack.c.b16 %v324, %v323
        %v341 = vpack.c.b16 %v326, %v325
        %v342 = vpack.c.b16 %v328, %v327
        %v343 = vpack.c.b16 %v330, %v329
        %v344 = vpack.c.b16 %v332, %v331
        %v345 = vpack.c.b16 %v334, %v333
        %v346 = vpack.c.b16 %v335, %v335
        %vm347 = vsmask.f32 7424
        %v349 = vshrl.u32 %v336, 16
        %v351 = vshll.u32 %v336, 16
        %v353 = vrot.slane %v351, 1
        %v354 = vor.u32 %v349, %v353
        %v356 = vshll.u32 %v337, 16
        %v358 = vrot.slane %v356, 1
        %v359 = vsel %vm347, %v354, %v358
        %v360 = vshrl.u32 %v337, 16
        %v362 = vor.u32 %v360, %v358
        %v364 = vshll.u32 %v338, 16
        %v366 = vrot.slane %v364, 1
        %v367 = vsel %vm347, %v362, %v366
        %v368 = vshrl.u32 %v338, 16
        %v370 = vor.u32 %v368, %v366
        %v372 = vshll.u32 %v339, 16
        %v374 = vrot.slane %v372, 1
        %v375 = vsel %vm347, %v370, %v374
        %v376 = vshrl.u32 %v339, 16
        %v378 = vor.u32 %v376, %v374
        %v380 = vshll.u32 %v340, 16
        %v382 = vrot.slane %v380, 1
        %v383 = vsel %vm347, %v378, %v382
        %v384 = vshrl.u32 %v340, 16
        %v386 = vor.u32 %v384, %v382
        %v388 = vshll.u32 %v341, 16
        %v390 = vrot.slane %v388, 1
        %v391 = vsel %vm347, %v386, %v390
        %v392 = vshrl.u32 %v341, 16
        %v394 = vor.u32 %v392, %v390
        %v396 = vshll.u32 %v342, 16
        %v398 = vrot.slane %v396, 1
        %v399 = vsel %vm347, %v394, %v398
        %v400 = vshrl.u32 %v342, 16
        %v402 = vor.u32 %v400, %v398
        %v404 = vshll.u32 %v343, 16
        %v406 = vrot.slane %v404, 1
        %v407 = vsel %vm347, %v402, %v406
        %v408 = vshrl.u32 %v343, 16
        %v410 = vor.u32 %v408, %v406
        %v412 = vshll.u32 %v344, 16
        %v414 = vrot.slane %v412, 1
        %v415 = vsel %vm347, %v410, %v414
        %v416 = vshrl.u32 %v344, 16
        %v418 = vor.u32 %v416, %v414
        %v420 = vshll.u32 %v345, 16
        %v422 = vrot.slane %v420, 1
        %v423 = vsel %vm347, %v418, %v422
        %v424 = vshrl.u32 %v345, 16
        %v426 = vor.u32 %v424, %v422
        %v428 = vshll.u32 %v346, 16
        %v430 = vrot.slane %v428, 1
        %v431 = vsel %vm347, %v426, %v430
        %v458 = vunpack.c.l.b16 %v278
        %v459 = vunpack.c.l.b16 %v279
        %v460 = vunpack.c.l.b16 %v280
        %v461 = vunpack.c.l.b16 %v281
        %v462 = vunpack.c.l.b16 %v282
        %v463 = vunpack.c.l.b16 %v283
        %v464 = vunpack.c.l.b16 %v284
        %v465 = vunpack.c.l.b16 %v285
        %v466 = vunpack.c.l.b16 %v286
        %v467 = vunpack.c.l.b16 %v287
        %v468 = vunpack.c.l.b16 %v288
        %v469 = vunpack.c.l.b16 %v289
        %v470 = vunpack.c.l.b16 %v290
        %v471 = vunpack.c.l.b16 %v291
        %v472 = vunpack.c.l.b16 %v292
        %v473 = vunpack.c.l.b16 %v293
        %v474 = vpack.c.b16 %v459, %v458
        %v475 = vpack.c.b16 %v461, %v460
        %v476 = vpack.c.b16 %v463, %v462
        %v477 = vpack.c.b16 %v465, %v464
        %v478 = vpack.c.b16 %v467, %v466
        %v479 = vpack.c.b16 %v469, %v468
        %v480 = vpack.c.b16 %v471, %v470
        %v481 = vpack.c.b16 %v473, %v472
        %490 = vmatprep.subr.bf16.mxu0 0
        %491 = vmatpush1.bf16.msra.mxu0 %v474
        %492 = vmatprep.subr.bf16.mxu0 0
        %493 = vmatpush1.bf16.msra.mxu0 %v475
        %494 = vmatprep.subr.bf16.mxu0 0
        %495 = vmatpush1.bf16.msra.mxu0 %v476
        %496 = vmatprep.subr.bf16.mxu0 0
        %497 = vmatpush1.bf16.msra.mxu0 %v477
        %498 = vmatprep.subr.bf16.mxu0 0
        %499 = vmatpush1.bf16.msra.mxu0 %v478
        %500 = vmatprep.subr.bf16.mxu0 0
        %501 = vmatpush1.bf16.msra.mxu0 %v479
        %502 = vmatprep.subr.bf16.mxu0 0
        %503 = vmatpush1.bf16.msra.mxu0 %v480
        %504 = vmatprep.subr.bf16.mxu0 0
        %505 = vmatpush1.bf16.msra.mxu0 %v481
        %506 = vmatprep.subr.bf16.mxu0 0
        %507 = vmatpush1.bf16.msra.mxu0 0
        %508 = vmatprep.subr.bf16.mxu0 0
        %509 = vmatpush1.bf16.msra.mxu0 0
        %510 = vmatprep.subr.bf16.mxu0 0
        %511 = vmatpush1.bf16.msra.mxu0 0
        %512 = vmatprep.subr.bf16.mxu0 0
        %513 = vmatpush1.bf16.msra.mxu0 0
        %514 = vmatprep.subr.bf16.mxu0 0
        %515 = vmatpush1.bf16.msra.mxu0 0
        %516 = vmatprep.subr.bf16.mxu0 0
        %517 = vmatpush1.bf16.msra.mxu0 0
        %518 = vmatprep.subr.bf16.mxu0 0
        %519 = vmatpush1.bf16.msra.mxu0 0
        %520 = vmatprep.subr.bf16.mxu0 0
        %521 = vmatpush1.bf16.msra.mxu0 0
        %522 = vmatprep.mubr.bf16.mxu0 0
        %523 = vmatmul.mubr.bf16.gmra.mrb[0].mxu0 %v359
        %v524 = vpop.f32.mrb[0].mxu0
        %v525 = vadd.f32 0.0, %v524
        %v526 = vpop.f32.mrb[0].mxu0
        %v527 = vpop.f32.mrb[0].mxu0
        %v528 = vadd.f32 0.0, %v527
        %v529 = vpop.f32.mrb[0].mxu0
        %530 = vmatprep.mubr.bf16.mxu0 0
        %531 = vmatmul.mubr.bf16.gmra.mrb[0].mxu0 %v367
        %v532 = vpop.f32.mrb[0].mxu0
        %v533 = vadd.f32 0.0, %v532
        %v534 = vpop.f32.mrb[0].mxu0
        %v535 = vpop.f32.mrb[0].mxu0
        %v536 = vadd.f32 0.0, %v535
        %v537 = vpop.f32.mrb[0].mxu0
        %538 = vmatprep.mubr.bf16.mxu0 0
        %539 = vmatmul.mubr.bf16.gmra.mrb[0].mxu0 %v375
        %v540 = vpop.f32.mrb[0].mxu0
        %v541 = vadd.f32 0.0, %v540
        %v542 = vpop.f32.mrb[0].mxu0
        %v543 = vpop.f32.mrb[0].mxu0
        %v544 = vadd.f32 0.0, %v543
        %v545 = vpop.f32.mrb[0].mxu0
        %546 = vmatprep.mubr.bf16.mxu0 0
        %547 = vmatmul.mubr.bf16.gmra.mrb[0].mxu0 %v383
        %v548 = vpop.f32.mrb[0].mxu0
        %v549 = vadd.f32 0.0, %v548
        %v550 = vpop.f32.mrb[0].mxu0
        %v551 = vpop.f32.mrb[0].mxu0
        %v552 = vadd.f32 0.0, %v551
        %v553 = vpop.f32.mrb[0].mxu0
        %554 = vmatprep.mubr.bf16.mxu0 0
        %555 = vmatmul.mubr.bf16.gmra.mrb[0].mxu0 %v391
        %v556 = vpop.f32.mrb[0].mxu0
        %v557 = vadd.f32 0.0, %v556
        %v558 = vpop.f32.mrb[0].mxu0
        %v559 = vpop.f32.mrb[0].mxu0
        %v560 = vadd.f32 0.0, %v559
        %v561 = vpop.f32.mrb[0].mxu0
        %562 = vmatprep.mubr.bf16.mxu0 0
        %563 = vmatmul.mubr.bf16.gmra.mrb[0].mxu0 %v399
        %v564 = vpop.f32.mrb[0].mxu0
        %v565 = vadd.f32 0.0, %v564
        %v566 = vpop.f32.mrb[0].mxu0
        %v567 = vpop.f32.mrb[0].mxu0
        %v568 = vadd.f32 0.0, %v567
        %v569 = vpop.f32.mrb[0].mxu0
        %570 = vmatprep.mubr.bf16.mxu0 0
        %571 = vmatmul.mubr.bf16.gmra.mrb[0].mxu0 %v407
        %v572 = vpop.f32.mrb[0].mxu0
        %v573 = vadd.f32 0.0, %v572
        %v574 = vpop.f32.mrb[0].mxu0
        %v575 = vpop.f32.mrb[0].mxu0
        %v576 = vadd.f32 0.0, %v575
        %v577 = vpop.f32.mrb[0].mxu0
        %578 = vmatprep.mubr.bf16.mxu0 0
        %579 = vmatmul.mubr.bf16.gmra.mrb[0].mxu0 %v415
        %v580 = vpop.f32.mrb[0].mxu0
        %v581 = vadd.f32 0.0, %v580
        %v582 = vpop.f32.mrb[0].mxu0
        %v583 = vpop.f32.mrb[0].mxu0
        %v584 = vadd.f32 0.0, %v583
        %v585 = vpop.f32.mrb[0].mxu0
        %586 = vmatprep.mubr.bf16.mxu0 0
        %587 = vmatmul.mubr.bf16.gmra.mrb[0].mxu0 %v423
        %v588 = vpop.f32.mrb[0].mxu0
        %v589 = vadd.f32 0.0, %v588
        %v590 = vpop.f32.mrb[0].mxu0
        %v591 = vpop.f32.mrb[0].mxu0
        %v592 = vadd.f32 0.0, %v591
        %v593 = vpop.f32.mrb[0].mxu0
        %594 = vmatprep.mubr.bf16.mxu0 0
        %595 = vmatmul.mubr.bf16.gmra.mrb[0].mxu0 %v431
        %v596 = vpop.f32.mrb[0].mxu0
        %v597 = vadd.f32 0.0, %v596
        %v598 = vpop.f32.mrb[0].mxu0
        %v599 = vpop.f32.mrb[0].mxu0
        %v600 = vadd.f32 0.0, %v599
        %v601 = vpop.f32.mrb[0].mxu0
        %602 = vdwg.mxu0
        %v629 = vunpack.c.l.b16 %v260
        %v630 = vunpack.c.l.b16 %v261
        %v631 = vunpack.c.l.b16 %v262
        %v632 = vunpack.c.l.b16 %v263
        %v633 = vunpack.c.l.b16 %v264
        %v634 = vunpack.c.l.b16 %v265
        %v635 = vunpack.c.l.b16 %v266
        %v636 = vunpack.c.l.b16 %v267
        %v637 = vunpack.c.l.b16 %v268
        %v638 = vunpack.c.l.b16 %v269
        %v639 = vunpack.c.l.b16 %v270
        %v640 = vunpack.c.l.b16 %v271
        %v641 = vunpack.c.l.b16 %v272
        %v642 = vunpack.c.l.b16 %v273
        %v643 = vunpack.c.l.b16 %v274
        %v644 = vunpack.c.l.b16 %v275
        %v645 = vpack.c.b16 %v630, %v629
        %v646 = vpack.c.b16 %v632, %v631
        %v647 = vpack.c.b16 %v634, %v633
        %v648 = vpack.c.b16 %v636, %v635
        %v649 = vpack.c.b16 %v638, %v637
        %v650 = vpack.c.b16 %v640, %v639
        %v651 = vpack.c.b16 %v642, %v641
        %v652 = vpack.c.b16 %v644, %v643
        %661 = vmatprep.subr.bf16.mxu0 0
        %662 = vmatpush1.bf16.msra.mxu0 %v645
        %663 = vmatprep.subr.bf16.mxu0 0
        %664 = vmatpush1.bf16.msra.mxu0 %v646
        %665 = vmatprep.subr.bf16.mxu0 0
        %666 = vmatpush1.bf16.msra.mxu0 %v647
        %667 = vmatprep.subr.bf16.mxu0 0
        %668 = vmatpush1.bf16.msra.mxu0 %v648
        %669 = vmatprep.subr.bf16.mxu0 0
        %670 = vmatpush1.bf16.msra.mxu0 %v649
        %671 = vmatprep.subr.bf16.mxu0 0
        %672 = vmatpush1.bf16.msra.mxu0 %v650
        %673 = vmatprep.subr.bf16.mxu0 0
        %674 = vmatpush1.bf16.msra.mxu0 %v651
        %675 = vmatprep.subr.bf16.mxu0 0
        %676 = vmatpush1.bf16.msra.mxu0 %v652
        %677 = vmatprep.subr.bf16.mxu0 0
        %678 = vmatpush1.bf16.msra.mxu0 0
        %679 = vmatprep.subr.bf16.mxu0 0
        %680 = vmatpush1.bf16.msra.mxu0 0
        %681 = vmatprep.subr.bf16.mxu0 0
        %682 = vmatpush1.bf16.msra.mxu0 0
        %683 = vmatprep.subr.bf16.mxu0 0
        %684 = vmatpush1.bf16.msra.mxu0 0
        %685 = vmatprep.subr.bf16.mxu0 0
        %686 = vmatpush1.bf16.msra.mxu0 0
        %687 = vmatprep.subr.bf16.mxu0 0
        %688 = vmatpush1.bf16.msra.mxu0 0
        %689 = vmatprep.subr.bf16.mxu0 0
        %690 = vmatpush1.bf16.msra.mxu0 0
        %691 = vmatprep.subr.bf16.mxu0 0
        %692 = vmatpush1.bf16.msra.mxu0 0
        %693 = vmatprep.mubr.bf16.mxu0 0
        %694 = vmatmul.mubr.bf16.gmra.mrb[0].mxu0 %v336
        %v695 = vpop.f32.mrb[0].mxu0
        %v696 = vadd.f32 %v525, %v695
        %v697 = vpop.f32.mrb[0].mxu0
        %v698 = vpop.f32.mrb[0].mxu0
        %v699 = vadd.f32 %v528, %v698
        %v700 = vpop.f32.mrb[0].mxu0
        %701 = vmatprep.mubr.bf16.mxu0 0
        %702 = vmatmul.mubr.bf16.gmra.mrb[0].mxu0 %v337
        %v703 = vpop.f32.mrb[0].mxu0
        %v704 = vadd.f32 %v533, %v703
        %v705 = vpop.f32.mrb[0].mxu0
        %v706 = vpop.f32.mrb[0].mxu0
        %v707 = vadd.f32 %v536, %v706
        %v708 = vpop.f32.mrb[0].mxu0
        %709 = vmatprep.mubr.bf16.mxu0 0
        %710 = vmatmul.mubr.bf16.gmra.mrb[0].mxu0 %v338
        %v711 = vpop.f32.mrb[0].mxu0
        %v712 = vadd.f32 %v541, %v711
        %v713 = vpop.f32.mrb[0].mxu0
        %v714 = vpop.f32.mrb[0].mxu0
        %v715 = vadd.f32 %v544, %v714
        %v716 = vpop.f32.mrb[0].mxu0
        %717 = vmatprep.mubr.bf16.mxu0 0
        %718 = vmatmul.mubr.bf16.gmra.mrb[0].mxu0 %v339
        %v719 = vpop.f32.mrb[0].mxu0
        %v720 = vadd.f32 %v549, %v719
        %v721 = vpop.f32.mrb[0].mxu0
        %v722 = vpop.f32.mrb[0].mxu0
        %v723 = vadd.f32 %v552, %v722
        %v724 = vpop.f32.mrb[0].mxu0
        %725 = vmatprep.mubr.bf16.mxu0 0
        %726 = vmatmul.mubr.bf16.gmra.mrb[0].mxu0 %v340
        %v727 = vpop.f32.mrb[0].mxu0
        %v728 = vadd.f32 %v557, %v727
        %v729 = vpop.f32.mrb[0].mxu0
        %v730 = vpop.f32.mrb[0].mxu0
        %v731 = vadd.f32 %v560, %v730
        %v732 = vpop.f32.mrb[0].mxu0
        %733 = vmatprep.mubr.bf16.mxu0 0
        %734 = vmatmul.mubr.bf16.gmra.mrb[0].mxu0 %v341
        %v735 = vpop.f32.mrb[0].mxu0
        %v736 = vadd.f32 %v565, %v735
        %v737 = vpop.f32.mrb[0].mxu0
        %v738 = vpop.f32.mrb[0].mxu0
        %v739 = vadd.f32 %v568, %v738
        %v740 = vpop.f32.mrb[0].mxu0
        %741 = vmatprep.mubr.bf16.mxu0 0
        %742 = vmatmul.mubr.bf16.gmra.mrb[0].mxu0 %v342
        %v743 = vpop.f32.mrb[0].mxu0
        %v744 = vadd.f32 %v573, %v743
        %v745 = vpop.f32.mrb[0].mxu0
        %v746 = vpop.f32.mrb[0].mxu0
        %v747 = vadd.f32 %v576, %v746
        %v748 = vpop.f32.mrb[0].mxu0
        %749 = vmatprep.mubr.bf16.mxu0 0
        %750 = vmatmul.mubr.bf16.gmra.mrb[0].mxu0 %v343
        %v751 = vpop.f32.mrb[0].mxu0
        %v752 = vadd.f32 %v581, %v751
        %v753 = vpop.f32.mrb[0].mxu0
        %v754 = vpop.f32.mrb[0].mxu0
        %v755 = vadd.f32 %v584, %v754
        %v756 = vpop.f32.mrb[0].mxu0
        %757 = vmatprep.mubr.bf16.mxu0 0
        %758 = vmatmul.mubr.bf16.gmra.mrb[0].mxu0 %v344
        %v759 = vpop.f32.mrb[0].mxu0
        %v760 = vadd.f32 %v589, %v759
        %v761 = vpop.f32.mrb[0].mxu0
        %v762 = vpop.f32.mrb[0].mxu0
        %v763 = vadd.f32 %v592, %v762
        %v764 = vpop.f32.mrb[0].mxu0
        %765 = vmatprep.mubr.bf16.mxu0 0
        %766 = vmatmul.mubr.bf16.gmra.mrb[0].mxu0 %v345
        %v767 = vpop.f32.mrb[0].mxu0
        %v768 = vadd.f32 %v597, %v767
        %v769 = vpop.f32.mrb[0].mxu0
        %v770 = vpop.f32.mrb[0].mxu0
        %v771 = vadd.f32 %v600, %v770
        %v772 = vpop.f32.mrb[0].mxu0
        %773 = vdwg.mxu0
        %v774 = vld [vmem:[%s206] sm:$0xe]
        %s775 = scalar_lea.vmem [#allocation5], 128
        %v776 = vld [vmem:[%s775] sm:$0xf]
        %v777 = vld [vmem:[%s775 + $0x4] sm:$0xf]
        %v778 = vld [vmem:[%s775 + $0x8] sm:$0xf]
        %v779 = vld [vmem:[%s775 + $0xc] sm:$0xf]
        %v780 = vld [vmem:[%s775 + $0x10] sm:$0xf]
        %v781 = vld [vmem:[%s775 + $0x14] sm:$0xf]
        %v782 = vld [vmem:[%s775 + $0x18] sm:$0xf]
        %v783 = vld [vmem:[%s775 + $0x1c] sm:$0xf]
        %v784 = vld [vmem:[%s775 + $0x20] sm:$0xf]
        %v785 = vld [vmem:[%s775 + $0x24] sm:$0xf]
        %v786 = vld [vmem:[%s775 + $0x28] sm:$0xf]
        %v787 = vld [vmem:[%s775 + $0x2c] sm:$0xf]
        %v788 = vld [vmem:[%s775 + $0x30] sm:$0xf]
        %v789 = vld [vmem:[%s775 + $0x34] sm:$0xf]
        %v790 = vld [vmem:[%s775 + $0x38] sm:$0xf]
        %v791 = vld [vmem:[%s775 + $0x3c] sm:$0xf]
        %v793 = vunpack.c.l.b16 %v774
        %v794 = vpack.c.b16 %v316, %v793
        %vm795 = vcmask 1046528
        %v796 = vrot.slane %v794, 1
        %v797 = vrot.slane %v337, 1
        %v798 = vsel %vm795, %v796, %v797
        %v799 = vrot.slane %v338, 1
        %v800 = vsel %vm795, %v797, %v799
        %v801 = vrot.slane %v339, 1
        %v802 = vsel %vm795, %v799, %v801
        %v803 = vrot.slane %v340, 1
        %v804 = vsel %vm795, %v801, %v803
        %v805 = vrot.slane %v341, 1
        %v806 = vsel %vm795, %v803, %v805
        %v807 = vrot.slane %v342, 1
        %v808 = vsel %vm795, %v805, %v807
        %v809 = vrot.slane %v343, 1
        %v810 = vsel %vm795, %v807, %v809
        %v811 = vrot.slane %v344, 1
        %v812 = vsel %vm795, %v809, %v811
        %v813 = vrot.slane %v345, 1
        %v814 = vsel %vm795, %v811, %v813
        %v815 = vrot.slane %v346, 1
        %v816 = vsel %vm795, %v813, %v815
        %v843 = vunpack.c.l.b16 %v776
        %v844 = vunpack.c.l.b16 %v777
        %v845 = vunpack.c.l.b16 %v778
        %v846 = vunpack.c.l.b16 %v779
        %v847 = vunpack.c.l.b16 %v780
        %v848 = vunpack.c.l.b16 %v781
        %v849 = vunpack.c.l.b16 %v782
        %v850 = vunpack.c.l.b16 %v783
        %v851 = vunpack.c.l.b16 %v784
        %v852 = vunpack.c.l.b16 %v785
        %v853 = vunpack.c.l.b16 %v786
        %v854 = vunpack.c.l.b16 %v787
        %v855 = vunpack.c.l.b16 %v788
        %v856 = vunpack.c.l.b16 %v789
        %v857 = vunpack.c.l.b16 %v790
        %v858 = vunpack.c.l.b16 %v791
        %v859 = vpack.c.b16 %v844, %v843
        %v860 = vpack.c.b16 %v846, %v845
        %v861 = vpack.c.b16 %v848, %v847
        %v862 = vpack.c.b16 %v850, %v849
        %v863 = vpack.c.b16 %v852, %v851
        %v864 = vpack.c.b16 %v854, %v853
        %v865 = vpack.c.b16 %v856, %v855
        %v866 = vpack.c.b16 %v858, %v857
        %875 = vmatprep.subr.bf16.mxu0 0
        %876 = vmatpush1.bf16.msra.mxu0 %v859
        %877 = vmatprep.subr.bf16.mxu0 0
        %878 = vmatpush1.bf16.msra.mxu0 %v860
        %879 = vmatprep.subr.bf16.mxu0 0
        %880 = vmatpush1.bf16.msra.mxu0 %v861
        %881 = vmatprep.subr.bf16.mxu0 0
        %882 = vmatpush1.bf16.msra.mxu0 %v862
        %883 = vmatprep.subr.bf16.mxu0 0
        %884 = vmatpush1.bf16.msra.mxu0 %v863
        %885 = vmatprep.subr.bf16.mxu0 0
        %886 = vmatpush1.bf16.msra.mxu0 %v864
        %887 = vmatprep.subr.bf16.mxu0 0
        %888 = vmatpush1.bf16.msra.mxu0 %v865
        %889 = vmatprep.subr.bf16.mxu0 0
        %890 = vmatpush1.bf16.msra.mxu0 %v866
        %891 = vmatprep.subr.bf16.mxu0 0
        %892 = vmatpush1.bf16.msra.mxu0 0
        %893 = vmatprep.subr.bf16.mxu0 0
        %894 = vmatpush1.bf16.msra.mxu0 0
        %895 = vmatprep.subr.bf16.mxu0 0
        %896 = vmatpush1.bf16.msra.mxu0 0
        %897 = vmatprep.subr.bf16.mxu0 0
        %898 = vmatpush1.bf16.msra.mxu0 0
        %899 = vmatprep.subr.bf16.mxu0 0
        %900 = vmatpush1.bf16.msra.mxu0 0
        %901 = vmatprep.subr.bf16.mxu0 0
        %902 = vmatpush1.bf16.msra.mxu0 0
        %903 = vmatprep.subr.bf16.mxu0 0
        %904 = vmatpush1.bf16.msra.mxu0 0
        %905 = vmatprep.subr.bf16.mxu0 0
        %906 = vmatpush1.bf16.msra.mxu0 0
        %907 = vmatprep.mubr.bf16.mxu0 0
        %908 = vmatmul.mubr.bf16.gmra.mrb[0].mxu0 %v798
        %v909 = vpop.f32.mrb[0].mxu0
        %v910 = vadd.f32 0.0, %v909
        %v911 = vpop.f32.mrb[0].mxu0
        %v912 = vpop.f32.mrb[0].mxu0
        %v913 = vadd.f32 0.0, %v912
        %v914 = vpop.f32.mrb[0].mxu0
        %915 = vmatprep.mubr.bf16.mxu0 0
        %916 = vmatmul.mubr.bf16.gmra.mrb[0].mxu0 %v800
        %v917 = vpop.f32.mrb[0].mxu0
        %v918 = vadd.f32 0.0, %v917
        %v919 = vpop.f32.mrb[0].mxu0
        %v920 = vpop.f32.mrb[0].mxu0
        %v921 = vadd.f32 0.0, %v920
        %v922 = vpop.f32.mrb[0].mxu0
        %923 = vmatprep.mubr.bf16.mxu0 0
        %924 = vmatmul.mubr.bf16.gmra.mrb[0].mxu0 %v802
        %v925 = vpop.f32.mrb[0].mxu0
        %v926 = vadd.f32 0.0, %v925
        %v927 = vpop.f32.mrb[0].mxu0
        %v928 = vpop.f32.mrb[0].mxu0
        %v929 = vadd.f32 0.0, %v928
        %v930 = vpop.f32.mrb[0].mxu0
        %931 = vmatprep.mubr.bf16.mxu0 0
        %932 = vmatmul.mubr.bf16.gmra.mrb[0].mxu0 %v804
        %v933 = vpop.f32.mrb[0].mxu0
        %v934 = vadd.f32 0.0, %v933
        %v935 = vpop.f32.mrb[0].mxu0
        %v936 = vpop.f32.mrb[0].mxu0
        %v937 = vadd.f32 0.0, %v936
        %v938 = vpop.f32.mrb[0].mxu0
        %939 = vmatprep.mubr.bf16.mxu0 0
        %940 = vmatmul.mubr.bf16.gmra.mrb[0].mxu0 %v806
        %v941 = vpop.f32.mrb[0].mxu0
        %v942 = vadd.f32 0.0, %v941
        %v943 = vpop.f32.mrb[0].mxu0
        %v944 = vpop.f32.mrb[0].mxu0
        %v945 = vadd.f32 0.0, %v944
        %v946 = vpop.f32.mrb[0].mxu0
        %947 = vmatprep.mubr.bf16.mxu0 0
        %948 = vmatmul.mubr.bf16.gmra.mrb[0].mxu0 %v808
        %v949 = vpop.f32.mrb[0].mxu0
        %v950 = vadd.f32 0.0, %v949
        %v951 = vpop.f32.mrb[0].mxu0
        %v952 = vpop.f32.mrb[0].mxu0
        %v953 = vadd.f32 0.0, %v952
        %v954 = vpop.f32.mrb[0].mxu0
        %955 = vmatprep.mubr.bf16.mxu0 0
        %956 = vmatmul.mubr.bf16.gmra.mrb[0].mxu0 %v810
        %v957 = vpop.f32.mrb[0].mxu0
        %v958 = vadd.f32 0.0, %v957
        %v959 = vpop.f32.mrb[0].mxu0
        %v960 = vpop.f32.mrb[0].mxu0
        %v961 = vadd.f32 0.0, %v960
        %v962 = vpop.f32.mrb[0].mxu0
        %963 = vmatprep.mubr.bf16.mxu0 0
        %964 = vmatmul.mubr.bf16.gmra.mrb[0].mxu0 %v812
        %v965 = vpop.f32.mrb[0].mxu0
        %v966 = vadd.f32 0.0, %v965
        %v967 = vpop.f32.mrb[0].mxu0
        %v968 = vpop.f32.mrb[0].mxu0
        %v969 = vadd.f32 0.0, %v968
        %v970 = vpop.f32.mrb[0].mxu0
        %971 = vmatprep.mubr.bf16.mxu0 0
        %972 = vmatmul.mubr.bf16.gmra.mrb[0].mxu0 %v814
        %v973 = vpop.f32.mrb[0].mxu0
        %v974 = vadd.f32 0.0, %v973
        %v975 = vpop.f32.mrb[0].mxu0
        %v976 = vpop.f32.mrb[0].mxu0
        %v977 = vadd.f32 0.0, %v976
        %v978 = vpop.f32.mrb[0].mxu0
        %979 = vmatprep.mubr.bf16.mxu0 0
        %980 = vmatmul.mubr.bf16.gmra.mrb[0].mxu0 %v816
        %v981 = vpop.f32.mrb[0].mxu0
        %v982 = vadd.f32 0.0, %v981
        %v983 = vpop.f32.mrb[0].mxu0
        %v984 = vpop.f32.mrb[0].mxu0
        %v985 = vadd.f32 0.0, %v984
        %v986 = vpop.f32.mrb[0].mxu0
        %987 = vdwg.mxu0
        %v988 = vadd.f32 %v696, %v910
        %v989 = vadd.f32 %v699, %v913
        %v990 = vadd.f32 %v704, %v918
        %v991 = vadd.f32 %v707, %v921
        %v992 = vadd.f32 %v712, %v926
        %v993 = vadd.f32 %v715, %v929
        %v994 = vadd.f32 %v720, %v934
        %v995 = vadd.f32 %v723, %v937
        %v996 = vadd.f32 %v728, %v942
        %v997 = vadd.f32 %v731, %v945
        %v998 = vadd.f32 %v736, %v950
        %v999 = vadd.f32 %v739, %v953
        %v1000 = vadd.f32 %v744, %v958
        %v1001 = vadd.f32 %v747, %v961
        %v1002 = vadd.f32 %v752, %v966
        %v1003 = vadd.f32 %v755, %v969
        %v1004 = vadd.f32 %v760, %v974
        %v1005 = vadd.f32 %v763, %v977
        %v1006 = vadd.f32 %v768, %v982
        %v1007 = vadd.f32 %v771, %v985
        %v1008 = vld [vmem:[%s206 + $0x8] sm:$0xf]
        %v1009 = vld [vmem:[%s206 + $0xc] sm:$0xf]
        %v1010 = vld [vmem:[%s206 + $0x10] sm:$0xf]
        %v1011 = vld [vmem:[%s206 + $0x14] sm:$0xf]
        %v1012 = vld [vmem:[%s206 + $0x18] sm:$0xf]
        %v1013 = vld [vmem:[%s206 + $0x1c] sm:$0xf]
        %v1014 = vld [vmem:[%s206 + $0x20] sm:$0xf]
        %v1015 = vld [vmem:[%s206 + $0x24] sm:$0xf]
        %v1016 = vld [vmem:[%s206 + $0x28] sm:$0xf]
        %v1017 = vld [vmem:[%s206 + $0x2c] sm:$0xf]
        %v1018 = vld [vmem:[%s206 + $0x30] sm:$0xf]
        %v1019 = vld [vmem:[%s206 + $0x34] sm:$0xf]
        %v1020 = vld [vmem:[%s206 + $0x38] sm:$0xf]
        %v1021 = vld [vmem:[%s206 + $0x3c] sm:$0xf]
        %v1022 = vld [vmem:[%s206 + $0x40] sm:$0xf]
        %v1023 = vld [vmem:[%s206 + $0x44] sm:$0xf]
        %v1024 = vld [vmem:[%s206 + $0x48] sm:$0xf]
        %v1025 = vld [vmem:[%s206 + $0x4c] sm:$0xf]
        %v1026 = vld [vmem:[%s206 + $0x50] sm:$0xf]
        %v1027 = vld [vmem:[%s206 + $0x54] sm:$0xf]
        %s1028 = scalar_lea.vmem [#allocation5], 192
        %v1029 = vld [vmem:[%s1028] sm:$0xf]
        %v1030 = vld [vmem:[%s1028 + $0x4] sm:$0xf]
        %v1031 = vld [vmem:[%s1028 + $0x8] sm:$0xf]
        %v1032 = vld [vmem:[%s1028 + $0xc] sm:$0xf]
        %v1033 = vld [vmem:[%s1028 + $0x10] sm:$0xf]
        %v1034 = vld [vmem:[%s1028 + $0x14] sm:$0xf]
        %v1035 = vld [vmem:[%s1028 + $0x18] sm:$0xf]
        %v1036 = vld [vmem:[%s1028 + $0x1c] sm:$0xf]
        %v1037 = vld [vmem:[%s1028 + $0x20] sm:$0xf]
        %v1038 = vld [vmem:[%s1028 + $0x24] sm:$0xf]
        %v1039 = vld [vmem:[%s1028 + $0x28] sm:$0xf]
        %v1040 = vld [vmem:[%s1028 + $0x2c] sm:$0xf]
        %v1041 = vld [vmem:[%s1028 + $0x30] sm:$0xf]
        %v1042 = vld [vmem:[%s1028 + $0x34] sm:$0xf]
        %v1043 = vld [vmem:[%s1028 + $0x38] sm:$0xf]
        %v1044 = vld [vmem:[%s1028 + $0x3c] sm:$0xf]
        %v1065 = vunpack.c.l.b16 %v1008
        %v1066 = vunpack.c.l.b16 %v1009
        %v1067 = vunpack.c.l.b16 %v1010
        %v1068 = vunpack.c.l.b16 %v1011
        %v1069 = vunpack.c.l.b16 %v1012
        %v1070 = vunpack.c.l.b16 %v1013
        %v1071 = vunpack.c.l.b16 %v1014
        %v1072 = vunpack.c.l.b16 %v1015
        %v1073 = vunpack.c.l.b16 %v1016
        %v1074 = vunpack.c.l.b16 %v1017
        %v1075 = vunpack.c.l.b16 %v1018
        %v1076 = vunpack.c.l.b16 %v1019
        %v1077 = vunpack.c.l.b16 %v1020
        %v1078 = vunpack.c.l.b16 %v1021
        %v1079 = vunpack.c.l.b16 %v1022
        %v1080 = vunpack.c.l.b16 %v1023
        %v1081 = vunpack.c.l.b16 %v1024
        %v1082 = vunpack.c.l.b16 %v1025
        %v1083 = vunpack.c.l.b16 %v1026
        %v1084 = vunpack.c.l.b16 %v1027
        %v1085 = vpack.c.b16 %v1066, %v1065
        %v1086 = vpack.c.b16 %v1068, %v1067
        %v1087 = vpack.c.b16 %v1070, %v1069
        %v1088 = vpack.c.b16 %v1072, %v1071
        %v1089 = vpack.c.b16 %v1074, %v1073
        %v1090 = vpack.c.b16 %v1076, %v1075
        %v1091 = vpack.c.b16 %v1078, %v1077
        %v1092 = vpack.c.b16 %v1080, %v1079
        %v1093 = vpack.c.b16 %v1082, %v1081
        %v1094 = vpack.c.b16 %v1084, %v1083
        %v1121 = vunpack.c.l.b16 %v1029
        %v1122 = vunpack.c.l.b16 %v1030
        %v1123 = vunpack.c.l.b16 %v1031
        %v1124 = vunpack.c.l.b16 %v1032
        %v1125 = vunpack.c.l.b16 %v1033
        %v1126 = vunpack.c.l.b16 %v1034
        %v1127 = vunpack.c.l.b16 %v1035
        %v1128 = vunpack.c.l.b16 %v1036
        %v1129 = vunpack.c.l.b16 %v1037
        %v1130 = vunpack.c.l.b16 %v1038
        %v1131 = vunpack.c.l.b16 %v1039
        %v1132 = vunpack.c.l.b16 %v1040
        %v1133 = vunpack.c.l.b16 %v1041
        %v1134 = vunpack.c.l.b16 %v1042
        %v1135 = vunpack.c.l.b16 %v1043
        %v1136 = vunpack.c.l.b16 %v1044
        %v1137 = vpack.c.b16 %v1122, %v1121
        %v1138 = vpack.c.b16 %v1124, %v1123
        %v1139 = vpack.c.b16 %v1126, %v1125
        %v1140 = vpack.c.b16 %v1128, %v1127
        %v1141 = vpack.c.b16 %v1130, %v1129
        %v1142 = vpack.c.b16 %v1132, %v1131
        %v1143 = vpack.c.b16 %v1134, %v1133
        %v1144 = vpack.c.b16 %v1136, %v1135
        %1153 = vmatprep.subr.bf16.mxu0 0
        %1154 = vmatpush1.bf16.msra.mxu0 %v1137
        %1155 = vmatprep.subr.bf16.mxu0 0
        %1156 = vmatpush1.bf16.msra.mxu0 %v1138
        %1157 = vmatprep.subr.bf16.mxu0 0
        %1158 = vmatpush1.bf16.msra.mxu0 %v1139
        %1159 = vmatprep.subr.bf16.mxu0 0
        %1160 = vmatpush1.bf16.msra.mxu0 %v1140
        %1161 = vmatprep.subr.bf16.mxu0 0
        %1162 = vmatpush1.bf16.msra.mxu0 %v1141
        %1163 = vmatprep.subr.bf16.mxu0 0
        %1164 = vmatpush1.bf16.msra.mxu0 %v1142
        %1165 = vmatprep.subr.bf16.mxu0 0
        %1166 = vmatpush1.bf16.msra.mxu0 %v1143
        %1167 = vmatprep.subr.bf16.mxu0 0
        %1168 = vmatpush1.bf16.msra.mxu0 %v1144
        %1169 = vmatprep.subr.bf16.mxu0 0
        %1170 = vmatpush1.bf16.msra.mxu0 0
        %1171 = vmatprep.subr.bf16.mxu0 0
        %1172 = vmatpush1.bf16.msra.mxu0 0
        %1173 = vmatprep.subr.bf16.mxu0 0
        %1174 = vmatpush1.bf16.msra.mxu0 0
        %1175 = vmatprep.subr.bf16.mxu0 0
        %1176 = vmatpush1.bf16.msra.mxu0 0
        %1177 = vmatprep.subr.bf16.mxu0 0
        %1178 = vmatpush1.bf16.msra.mxu0 0
        %1179 = vmatprep.subr.bf16.mxu0 0
        %1180 = vmatpush1.bf16.msra.mxu0 0
        %1181 = vmatprep.subr.bf16.mxu0 0
        %1182 = vmatpush1.bf16.msra.mxu0 0
        %1183 = vmatprep.subr.bf16.mxu0 0
        %1184 = vmatpush1.bf16.msra.mxu0 0
        %1185 = vmatprep.mubr.bf16.mxu0 0
        %1186 = vmatmul.mubr.bf16.gmra.mrb[0].mxu0 %v1085
        %v1187 = vpop.f32.mrb[0].mxu0
        %v1188 = vadd.f32 0.0, %v1187
        %v1189 = vpop.f32.mrb[0].mxu0
        %v1190 = vpop.f32.mrb[0].mxu0
        %v1191 = vadd.f32 0.0, %v1190
        %v1192 = vpop.f32.mrb[0].mxu0
        %1193 = vmatprep.mubr.bf16.mxu0 0
        %1194 = vmatmul.mubr.bf16.gmra.mrb[0].mxu0 %v1086
        %v1195 = vpop.f32.mrb[0].mxu0
        %v1196 = vadd.f32 0.0, %v1195
        %v1197 = vpop.f32.mrb[0].mxu0
        %v1198 = vpop.f32.mrb[0].mxu0
        %v1199 = vadd.f32 0.0, %v1198
        %v1200 = vpop.f32.mrb[0].mxu0
        %1201 = vmatprep.mubr.bf16.mxu0 0
        %1202 = vmatmul.mubr.bf16.gmra.mrb[0].mxu0 %v1087
        %v1203 = vpop.f32.mrb[0].mxu0
        %v1204 = vadd.f32 0.0, %v1203
        %v1205 = vpop.f32.mrb[0].mxu0
        %v1206 = vpop.f32.mrb[0].mxu0
        %v1207 = vadd.f32 0.0, %v1206
        %v1208 = vpop.f32.mrb[0].mxu0
        %1209 = vmatprep.mubr.bf16.mxu0 0
        %1210 = vmatmul.mubr.bf16.gmra.mrb[0].mxu0 %v1088
        %v1211 = vpop.f32.mrb[0].mxu0
        %v1212 = vadd.f32 0.0, %v1211
        %v1213 = vpop.f32.mrb[0].mxu0
        %v1214 = vpop.f32.mrb[0].mxu0
        %v1215 = vadd.f32 0.0, %v1214
        %v1216 = vpop.f32.mrb[0].mxu0
        %1217 = vmatprep.mubr.bf16.mxu0 0
        %1218 = vmatmul.mubr.bf16.gmra.mrb[0].mxu0 %v1089
        %v1219 = vpop.f32.mrb[0].mxu0
        %v1220 = vadd.f32 0.0, %v1219
        %v1221 = vpop.f32.mrb[0].mxu0
        %v1222 = vpop.f32.mrb[0].mxu0
        %v1223 = vadd.f32 0.0, %v1222
        %v1224 = vpop.f32.mrb[0].mxu0
        %1225 = vmatprep.mubr.bf16.mxu0 0
        %1226 = vmatmul.mubr.bf16.gmra.mrb[0].mxu0 %v1090
        %v1227 = vpop.f32.mrb[0].mxu0
        %v1228 = vadd.f32 0.0, %v1227
        %v1229 = vpop.f32.mrb[0].mxu0
        %v1230 = vpop.f32.mrb[0].mxu0
        %v1231 = vadd.f32 0.0, %v1230
        %v1232 = vpop.f32.mrb[0].mxu0
        %1233 = vmatprep.mubr.bf16.mxu0 0
        %1234 = vmatmul.mubr.bf16.gmra.mrb[0].mxu0 %v1091
        %v1235 = vpop.f32.mrb[0].mxu0
        %v1236 = vadd.f32 0.0, %v1235
        %v1237 = vpop.f32.mrb[0].mxu0
        %v1238 = vpop.f32.mrb[0].mxu0
        %v1239 = vadd.f32 0.0, %v1238
        %v1240 = vpop.f32.mrb[0].mxu0
        %1241 = vmatprep.mubr.bf16.mxu0 0
        %1242 = vmatmul.mubr.bf16.gmra.mrb[0].mxu0 %v1092
        %v1243 = vpop.f32.mrb[0].mxu0
        %v1244 = vadd.f32 0.0, %v1243
        %v1245 = vpop.f32.mrb[0].mxu0
        %v1246 = vpop.f32.mrb[0].mxu0
        %v1247 = vadd.f32 0.0, %v1246
        %v1248 = vpop.f32.mrb[0].mxu0
        %1249 = vmatprep.mubr.bf16.mxu0 0
        %1250 = vmatmul.mubr.bf16.gmra.mrb[0].mxu0 %v1093
        %v1251 = vpop.f32.mrb[0].mxu0
        %v1252 = vadd.f32 0.0, %v1251
        %v1253 = vpop.f32.mrb[0].mxu0
        %v1254 = vpop.f32.mrb[0].mxu0
        %v1255 = vadd.f32 0.0, %v1254
        %v1256 = vpop.f32.mrb[0].mxu0
        %1257 = vmatprep.mubr.bf16.mxu0 0
        %1258 = vmatmul.mubr.bf16.gmra.mrb[0].mxu0 %v1094
        %v1259 = vpop.f32.mrb[0].mxu0
        %v1260 = vadd.f32 0.0, %v1259
        %v1261 = vpop.f32.mrb[0].mxu0
        %v1262 = vpop.f32.mrb[0].mxu0
        %v1263 = vadd.f32 0.0, %v1262
        %v1264 = vpop.f32.mrb[0].mxu0
        %1265 = vdwg.mxu0
        %v1266 = vadd.f32 %v988, %v1188
        %v1267 = vadd.f32 %v989, %v1191
        %v1268 = vadd.f32 %v990, %v1196
        %v1269 = vadd.f32 %v991, %v1199
        %v1270 = vadd.f32 %v992, %v1204
        %v1271 = vadd.f32 %v993, %v1207
        %v1272 = vadd.f32 %v994, %v1212
        %v1273 = vadd.f32 %v995, %v1215
        %v1274 = vadd.f32 %v996, %v1220
        %v1275 = vadd.f32 %v997, %v1223
        %v1276 = vadd.f32 %v998, %v1228
        %v1277 = vadd.f32 %v999, %v1231
        %v1278 = vadd.f32 %v1000, %v1236
        %v1279 = vadd.f32 %v1001, %v1239
        %v1280 = vadd.f32 %v1002, %v1244
        %v1281 = vadd.f32 %v1003, %v1247
        %v1282 = vadd.f32 %v1004, %v1252
        %v1283 = vadd.f32 %v1005, %v1255
        %v1284 = vadd.f32 %v1006, %v1260
        %v1285 = vadd.f32 %v1007, %v1263
        %v1286 = vld [vmem:[%s206 + $0x8] sm:$0xf]
        %v1287 = vld [vmem:[%s206 + $0xc] sm:$0xf]
        %v1288 = vld [vmem:[%s206 + $0x10] sm:$0xf]
        %v1289 = vld [vmem:[%s206 + $0x14] sm:$0xf]
        %v1290 = vld [vmem:[%s206 + $0x18] sm:$0xf]
        %v1291 = vld [vmem:[%s206 + $0x1c] sm:$0xf]
        %v1292 = vld [vmem:[%s206 + $0x20] sm:$0xf]
        %v1293 = vld [vmem:[%s206 + $0x24] sm:$0xf]
        %v1294 = vld [vmem:[%s206 + $0x28] sm:$0xf]
        %v1295 = vld [vmem:[%s206 + $0x2c] sm:$0xf]
        %v1296 = vld [vmem:[%s206 + $0x30] sm:$0xf]
        %v1297 = vld [vmem:[%s206 + $0x34] sm:$0xf]
        %v1298 = vld [vmem:[%s206 + $0x38] sm:$0xf]
        %v1299 = vld [vmem:[%s206 + $0x3c] sm:$0xf]
        %v1300 = vld [vmem:[%s206 + $0x40] sm:$0xf]
        %v1301 = vld [vmem:[%s206 + $0x44] sm:$0xf]
        %v1302 = vld [vmem:[%s206 + $0x48] sm:$0xf]
        %v1303 = vld [vmem:[%s206 + $0x4c] sm:$0xf]
        %v1304 = vld [vmem:[%s206 + $0x50] sm:$0xf]
        %v1305 = vld [vmem:[%s206 + $0x54] sm:$0xf]
        %v1306 = vld [vmem:[%s206 + $0x58] sm:$0x1]
        %s1307 = scalar_lea.vmem [#allocation5], 256
        %v1308 = vld [vmem:[%s1307] sm:$0xf]
        %v1309 = vld [vmem:[%s1307 + $0x4] sm:$0xf]
        %v1310 = vld [vmem:[%s1307 + $0x8] sm:$0xf]
        %v1311 = vld [vmem:[%s1307 + $0xc] sm:$0xf]
        %v1312 = vld [vmem:[%s1307 + $0x10] sm:$0xf]
        %v1313 = vld [vmem:[%s1307 + $0x14] sm:$0xf]
        %v1314 = vld [vmem:[%s1307 + $0x18] sm:$0xf]
        %v1315 = vld [vmem:[%s1307 + $0x1c] sm:$0xf]
        %v1316 = vld [vmem:[%s1307 + $0x20] sm:$0xf]
        %v1317 = vld [vmem:[%s1307 + $0x24] sm:$0xf]
        %v1318 = vld [vmem:[%s1307 + $0x28] sm:$0xf]
        %v1319 = vld [vmem:[%s1307 + $0x2c] sm:$0xf]
        %v1320 = vld [vmem:[%s1307 + $0x30] sm:$0xf]
        %v1321 = vld [vmem:[%s1307 + $0x34] sm:$0xf]
        %v1322 = vld [vmem:[%s1307 + $0x38] sm:$0xf]
        %v1323 = vld [vmem:[%s1307 + $0x3c] sm:$0xf]
        %v1345 = vunpack.c.l.b16 %v1286
        %v1346 = vunpack.c.l.b16 %v1287
        %v1347 = vunpack.c.l.b16 %v1288
        %v1348 = vunpack.c.l.b16 %v1289
        %v1349 = vunpack.c.l.b16 %v1290
        %v1350 = vunpack.c.l.b16 %v1291
        %v1351 = vunpack.c.l.b16 %v1292
        %v1352 = vunpack.c.l.b16 %v1293
        %v1353 = vunpack.c.l.b16 %v1294
        %v1354 = vunpack.c.l.b16 %v1295
        %v1355 = vunpack.c.l.b16 %v1296
        %v1356 = vunpack.c.l.b16 %v1297
        %v1357 = vunpack.c.l.b16 %v1298
        %v1358 = vunpack.c.l.b16 %v1299
        %v1359 = vunpack.c.l.b16 %v1300
        %v1360 = vunpack.c.l.b16 %v1301
        %v1361 = vunpack.c.l.b16 %v1302
        %v1362 = vunpack.c.l.b16 %v1303
        %v1363 = vunpack.c.l.b16 %v1304
        %v1364 = vunpack.c.l.b16 %v1305
        %v1365 = vunpack.c.l.b16 %v1306
        %v1366 = vpack.c.b16 %v1346, %v1345
        %v1367 = vpack.c.b16 %v1348, %v1347
        %v1368 = vpack.c.b16 %v1350, %v1349
        %v1369 = vpack.c.b16 %v1352, %v1351
        %v1370 = vpack.c.b16 %v1354, %v1353
        %v1371 = vpack.c.b16 %v1356, %v1355
        %v1372 = vpack.c.b16 %v1358, %v1357
        %v1373 = vpack.c.b16 %v1360, %v1359
        %v1374 = vpack.c.b16 %v1362, %v1361
        %v1375 = vpack.c.b16 %v1364, %v1363
        %v1376 = vpack.c.b16 %v1365, %v1365
        %v1378 = vshrl.u32 %v1366, 16
        %v1380 = vshll.u32 %v1366, 16
        %v1382 = vrot.slane %v1380, 1
        %v1383 = vor.u32 %v1378, %v1382
        %v1385 = vshll.u32 %v1367, 16
        %v1387 = vrot.slane %v1385, 1
        %v1388 = vsel %vm347, %v1383, %v1387
        %v1389 = vshrl.u32 %v1367, 16
        %v1391 = vor.u32 %v1389, %v1387
        %v1393 = vshll.u32 %v1368, 16
        %v1395 = vrot.slane %v1393, 1
        %v1396 = vsel %vm347, %v1391, %v1395
        %v1397 = vshrl.u32 %v1368, 16
        %v1399 = vor.u32 %v1397, %v1395
        %v1401 = vshll.u32 %v1369, 16
        %v1403 = vrot.slane %v1401, 1
        %v1404 = vsel %vm347, %v1399, %v1403
        %v1405 = vshrl.u32 %v1369, 16
        %v1407 = vor.u32 %v1405, %v1403
        %v1409 = vshll.u32 %v1370, 16
        %v1411 = vrot.slane %v1409, 1
        %v1412 = vsel %vm347, %v1407, %v1411
        %v1413 = vshrl.u32 %v1370, 16
        %v1415 = vor.u32 %v1413, %v1411
        %v1417 = vshll.u32 %v1371, 16
        %v1419 = vrot.slane %v1417, 1
        %v1420 = vsel %vm347, %v1415, %v1419
        %v1421 = vshrl.u32 %v1371, 16
        %v1423 = vor.u32 %v1421, %v1419
        %v1425 = vshll.u32 %v1372, 16
        %v1427 = vrot.slane %v1425, 1
        %v1428 = vsel %vm347, %v1423, %v1427
        %v1429 = vshrl.u32 %v1372, 16
        %v1431 = vor.u32 %v1429, %v1427
        %v1433 = vshll.u32 %v1373, 16
        %v1435 = vrot.slane %v1433, 1
        %v1436 = vsel %vm347, %v1431, %v1435
        %v1437 = vshrl.u32 %v1373, 16
        %v1439 = vor.u32 %v1437, %v1435
        %v1441 = vshll.u32 %v1374, 16
        %v1443 = vrot.slane %v1441, 1
        %v1444 = vsel %vm347, %v1439, %v1443
        %v1445 = vshrl.u32 %v1374, 16
        %v1447 = vor.u32 %v1445, %v1443
        %v1449 = vshll.u32 %v1375, 16
        %v1451 = vrot.slane %v1449, 1
        %v1452 = vsel %vm347, %v1447, %v1451
        %v1453 = vshrl.u32 %v1375, 16
        %v1455 = vor.u32 %v1453, %v1451
        %v1457 = vshll.u32 %v1376, 16
        %v1459 = vrot.slane %v1457, 1
        %v1460 = vsel %vm347, %v1455, %v1459
        %v1487 = vunpack.c.l.b16 %v1308
        %v1488 = vunpack.c.l.b16 %v1309
        %v1489 = vunpack.c.l.b16 %v1310
        %v1490 = vunpack.c.l.b16 %v1311
        %v1491 = vunpack.c.l.b16 %v1312
        %v1492 = vunpack.c.l.b16 %v1313
        %v1493 = vunpack.c.l.b16 %v1314
        %v1494 = vunpack.c.l.b16 %v1315
        %v1495 = vunpack.c.l.b16 %v1316
        %v1496 = vunpack.c.l.b16 %v1317
        %v1497 = vunpack.c.l.b16 %v1318
        %v1498 = vunpack.c.l.b16 %v1319
        %v1499 = vunpack.c.l.b16 %v1320
        %v1500 = vunpack.c.l.b16 %v1321
        %v1501 = vunpack.c.l.b16 %v1322
        %v1502 = vunpack.c.l.b16 %v1323
        %v1503 = vpack.c.b16 %v1488, %v1487
        %v1504 = vpack.c.b16 %v1490, %v1489
        %v1505 = vpack.c.b16 %v1492, %v1491
        %v1506 = vpack.c.b16 %v1494, %v1493
        %v1507 = vpack.c.b16 %v1496, %v1495
        %v1508 = vpack.c.b16 %v1498, %v1497
        %v1509 = vpack.c.b16 %v1500, %v1499
        %v1510 = vpack.c.b16 %v1502, %v1501
        %1519 = vmatprep.subr.bf16.mxu0 0
        %1520 = vmatpush1.bf16.msra.mxu0 %v1503
        %1521 = vmatprep.subr.bf16.mxu0 0
        %1522 = vmatpush1.bf16.msra.mxu0 %v1504
        %1523 = vmatprep.subr.bf16.mxu0 0
        %1524 = vmatpush1.bf16.msra.mxu0 %v1505
        %1525 = vmatprep.subr.bf16.mxu0 0
        %1526 = vmatpush1.bf16.msra.mxu0 %v1506
        %1527 = vmatprep.subr.bf16.mxu0 0
        %1528 = vmatpush1.bf16.msra.mxu0 %v1507
        %1529 = vmatprep.subr.bf16.mxu0 0
        %1530 = vmatpush1.bf16.msra.mxu0 %v1508
        %1531 = vmatprep.subr.bf16.mxu0 0
        %1532 = vmatpush1.bf16.msra.mxu0 %v1509
        %1533 = vmatprep.subr.bf16.mxu0 0
        %1534 = vmatpush1.bf16.msra.mxu0 %v1510
        %1535 = vmatprep.subr.bf16.mxu0 0
        %1536 = vmatpush1.bf16.msra.mxu0 0
        %1537 = vmatprep.subr.bf16.mxu0 0
        %1538 = vmatpush1.bf16.msra.mxu0 0
        %1539 = vmatprep.subr.bf16.mxu0 0
        %1540 = vmatpush1.bf16.msra.mxu0 0
        %1541 = vmatprep.subr.bf16.mxu0 0
        %1542 = vmatpush1.bf16.msra.mxu0 0
        %1543 = vmatprep.subr.bf16.mxu0 0
        %1544 = vmatpush1.bf16.msra.mxu0 0
        %1545 = vmatprep.subr.bf16.mxu0 0
        %1546 = vmatpush1.bf16.msra.mxu0 0
        %1547 = vmatprep.subr.bf16.mxu0 0
        %1548 = vmatpush1.bf16.msra.mxu0 0
        %1549 = vmatprep.subr.bf16.mxu0 0
        %1550 = vmatpush1.bf16.msra.mxu0 0
        %1551 = vmatprep.mubr.bf16.mxu0 0
        %1552 = vmatmul.mubr.bf16.gmra.mrb[0].mxu0 %v1388
        %v1553 = vpop.f32.mrb[0].mxu0
        %v1554 = vadd.f32 0.0, %v1553
        %v1555 = vpop.f32.mrb[0].mxu0
        %v1556 = vpop.f32.mrb[0].mxu0
        %v1557 = vadd.f32 0.0, %v1556
        %v1558 = vpop.f32.mrb[0].mxu0
        %1559 = vmatprep.mubr.bf16.mxu0 0
        %1560 = vmatmul.mubr.bf16.gmra.mrb[0].mxu0 %v1396
        %v1561 = vpop.f32.mrb[0].mxu0
        %v1562 = vadd.f32 0.0, %v1561
        %v1563 = vpop.f32.mrb[0].mxu0
        %v1564 = vpop.f32.mrb[0].mxu0
        %v1565 = vadd.f32 0.0, %v1564
        %v1566 = vpop.f32.mrb[0].mxu0
        %1567 = vmatprep.mubr.bf16.mxu0 0
        %1568 = vmatmul.mubr.bf16.gmra.mrb[0].mxu0 %v1404
        %v1569 = vpop.f32.mrb[0].mxu0
        %v1570 = vadd.f32 0.0, %v1569
        %v1571 = vpop.f32.mrb[0].mxu0
        %v1572 = vpop.f32.mrb[0].mxu0
        %v1573 = vadd.f32 0.0, %v1572
        %v1574 = vpop.f32.mrb[0].mxu0
        %1575 = vmatprep.mubr.bf16.mxu0 0
        %1576 = vmatmul.mubr.bf16.gmra.mrb[0].mxu0 %v1412
        %v1577 = vpop.f32.mrb[0].mxu0
        %v1578 = vadd.f32 0.0, %v1577
        %v1579 = vpop.f32.mrb[0].mxu0
        %v1580 = vpop.f32.mrb[0].mxu0
        %v1581 = vadd.f32 0.0, %v1580
        %v1582 = vpop.f32.mrb[0].mxu0
        %1583 = vmatprep.mubr.bf16.mxu0 0
        %1584 = vmatmul.mubr.bf16.gmra.mrb[0].mxu0 %v1420
        %v1585 = vpop.f32.mrb[0].mxu0
        %v1586 = vadd.f32 0.0, %v1585
        %v1587 = vpop.f32.mrb[0].mxu0
        %v1588 = vpop.f32.mrb[0].mxu0
        %v1589 = vadd.f32 0.0, %v1588
        %v1590 = vpop.f32.mrb[0].mxu0
        %1591 = vmatprep.mubr.bf16.mxu0 0
        %1592 = vmatmul.mubr.bf16.gmra.mrb[0].mxu0 %v1428
        %v1593 = vpop.f32.mrb[0].mxu0
        %v1594 = vadd.f32 0.0, %v1593
        %v1595 = vpop.f32.mrb[0].mxu0
        %v1596 = vpop.f32.mrb[0].mxu0
        %v1597 = vadd.f32 0.0, %v1596
        %v1598 = vpop.f32.mrb[0].mxu0
        %1599 = vmatprep.mubr.bf16.mxu0 0
        %1600 = vmatmul.mubr.bf16.gmra.mrb[0].mxu0 %v1436
        %v1601 = vpop.f32.mrb[0].mxu0
        %v1602 = vadd.f32 0.0, %v1601
        %v1603 = vpop.f32.mrb[0].mxu0
        %v1604 = vpop.f32.mrb[0].mxu0
        %v1605 = vadd.f32 0.0, %v1604
        %v1606 = vpop.f32.mrb[0].mxu0
        %1607 = vmatprep.mubr.bf16.mxu0 0
        %1608 = vmatmul.mubr.bf16.gmra.mrb[0].mxu0 %v1444
        %v1609 = vpop.f32.mrb[0].mxu0
        %v1610 = vadd.f32 0.0, %v1609
        %v1611 = vpop.f32.mrb[0].mxu0
        %v1612 = vpop.f32.mrb[0].mxu0
        %v1613 = vadd.f32 0.0, %v1612
        %v1614 = vpop.f32.mrb[0].mxu0
        %1615 = vmatprep.mubr.bf16.mxu0 0
        %1616 = vmatmul.mubr.bf16.gmra.mrb[0].mxu0 %v1452
        %v1617 = vpop.f32.mrb[0].mxu0
        %v1618 = vadd.f32 0.0, %v1617
        %v1619 = vpop.f32.mrb[0].mxu0
        %v1620 = vpop.f32.mrb[0].mxu0
        %v1621 = vadd.f32 0.0, %v1620
        %v1622 = vpop.f32.mrb[0].mxu0
        %1623 = vmatprep.mubr.bf16.mxu0 0
        %1624 = vmatmul.mubr.bf16.gmra.mrb[0].mxu0 %v1460
        %v1625 = vpop.f32.mrb[0].mxu0
        %v1626 = vadd.f32 0.0, %v1625
        %v1627 = vpop.f32.mrb[0].mxu0
        %v1628 = vpop.f32.mrb[0].mxu0
        %v1629 = vadd.f32 0.0, %v1628
        %v1630 = vpop.f32.mrb[0].mxu0
        %1631 = vdwg.mxu0
        %v1632 = vadd.f32 %v1266, %v1554
        %v1633 = vadd.f32 %v1267, %v1557
        %v1634 = vadd.f32 %v1268, %v1562
        %v1635 = vadd.f32 %v1269, %v1565
        %v1636 = vadd.f32 %v1270, %v1570
        %v1637 = vadd.f32 %v1271, %v1573
        %v1638 = vadd.f32 %v1272, %v1578
        %v1639 = vadd.f32 %v1273, %v1581
        %v1640 = vadd.f32 %v1274, %v1586
        %v1641 = vadd.f32 %v1275, %v1589
        %v1642 = vadd.f32 %v1276, %v1594
        %v1643 = vadd.f32 %v1277, %v1597
        %v1644 = vadd.f32 %v1278, %v1602
        %v1645 = vadd.f32 %v1279, %v1605
        %v1646 = vadd.f32 %v1280, %v1610
        %v1647 = vadd.f32 %v1281, %v1613
        %v1648 = vadd.f32 %v1282, %v1618
        %v1649 = vadd.f32 %v1283, %v1621
        %v1650 = vadd.f32 %v1284, %v1626
        %v1651 = vadd.f32 %v1285, %v1629
        %v1652 = vld [vmem:[%s206 + $0x8] sm:$0xe]
        %s1653 = scalar_lea.vmem [#allocation5], 320
        %v1654 = vld [vmem:[%s1653] sm:$0xf]
        %v1655 = vld [vmem:[%s1653 + $0x4] sm:$0xf]
        %v1656 = vld [vmem:[%s1653 + $0x8] sm:$0xf]
        %v1657 = vld [vmem:[%s1653 + $0xc] sm:$0xf]
        %v1658 = vld [vmem:[%s1653 + $0x10] sm:$0xf]
        %v1659 = vld [vmem:[%s1653 + $0x14] sm:$0xf]
        %v1660 = vld [vmem:[%s1653 + $0x18] sm:$0xf]
        %v1661 = vld [vmem:[%s1653 + $0x1c] sm:$0xf]
        %v1662 = vld [vmem:[%s1653 + $0x20] sm:$0xf]
        %v1663 = vld [vmem:[%s1653 + $0x24] sm:$0xf]
        %v1664 = vld [vmem:[%s1653 + $0x28] sm:$0xf]
        %v1665 = vld [vmem:[%s1653 + $0x2c] sm:$0xf]
        %v1666 = vld [vmem:[%s1653 + $0x30] sm:$0xf]
        %v1667 = vld [vmem:[%s1653 + $0x34] sm:$0xf]
        %v1668 = vld [vmem:[%s1653 + $0x38] sm:$0xf]
        %v1669 = vld [vmem:[%s1653 + $0x3c] sm:$0xf]
        %v1671 = vunpack.c.l.b16 %v1652
        %v1672 = vpack.c.b16 %v1346, %v1671
        %v1673 = vrot.slane %v1672, 1
        %v1674 = vrot.slane %v1367, 1
        %v1675 = vsel %vm795, %v1673, %v1674
        %v1676 = vrot.slane %v1368, 1
        %v1677 = vsel %vm795, %v1674, %v1676
        %v1678 = vrot.slane %v1369, 1
        %v1679 = vsel %vm795, %v1676, %v1678
        %v1680 = vrot.slane %v1370, 1
        %v1681 = vsel %vm795, %v1678, %v1680
        %v1682 = vrot.slane %v1371, 1
        %v1683 = vsel %vm795, %v1680, %v1682
        %v1684 = vrot.slane %v1372, 1
        %v1685 = vsel %vm795, %v1682, %v1684
        %v1686 = vrot.slane %v1373, 1
        %v1687 = vsel %vm795, %v1684, %v1686
        %v1688 = vrot.slane %v1374, 1
        %v1689 = vsel %vm795, %v1686, %v1688
        %v1690 = vrot.slane %v1375, 1
        %v1691 = vsel %vm795, %v1688, %v1690
        %v1692 = vrot.slane %v1376, 1
        %v1693 = vsel %vm795, %v1690, %v1692
        %v1720 = vunpack.c.l.b16 %v1654
        %v1721 = vunpack.c.l.b16 %v1655
        %v1722 = vunpack.c.l.b16 %v1656
        %v1723 = vunpack.c.l.b16 %v1657
        %v1724 = vunpack.c.l.b16 %v1658
        %v1725 = vunpack.c.l.b16 %v1659
        %v1726 = vunpack.c.l.b16 %v1660
        %v1727 = vunpack.c.l.b16 %v1661
        %v1728 = vunpack.c.l.b16 %v1662
        %v1729 = vunpack.c.l.b16 %v1663
        %v1730 = vunpack.c.l.b16 %v1664
        %v1731 = vunpack.c.l.b16 %v1665
        %v1732 = vunpack.c.l.b16 %v1666
        %v1733 = vunpack.c.l.b16 %v1667
        %v1734 = vunpack.c.l.b16 %v1668
        %v1735 = vunpack.c.l.b16 %v1669
        %v1736 = vpack.c.b16 %v1721, %v1720
        %v1737 = vpack.c.b16 %v1723, %v1722
        %v1738 = vpack.c.b16 %v1725, %v1724
        %v1739 = vpack.c.b16 %v1727, %v1726
        %v1740 = vpack.c.b16 %v1729, %v1728
        %v1741 = vpack.c.b16 %v1731, %v1730
        %v1742 = vpack.c.b16 %v1733, %v1732
        %v1743 = vpack.c.b16 %v1735, %v1734
        %1752 = vmatprep.subr.bf16.mxu0 0
        %1753 = vmatpush1.bf16.msra.mxu0 %v1736
        %1754 = vmatprep.subr.bf16.mxu0 0
        %1755 = vmatpush1.bf16.msra.mxu0 %v1737
        %1756 = vmatprep.subr.bf16.mxu0 0
        %1757 = vmatpush1.bf16.msra.mxu0 %v1738
        %1758 = vmatprep.subr.bf16.mxu0 0
        %1759 = vmatpush1.bf16.msra.mxu0 %v1739
        %1760 = vmatprep.subr.bf16.mxu0 0
        %1761 = vmatpush1.bf16.msra.mxu0 %v1740
        %1762 = vmatprep.subr.bf16.mxu0 0
        %1763 = vmatpush1.bf16.msra.mxu0 %v1741
        %1764 = vmatprep.subr.bf16.mxu0 0
        %1765 = vmatpush1.bf16.msra.mxu0 %v1742
        %1766 = vmatprep.subr.bf16.mxu0 0
        %1767 = vmatpush1.bf16.msra.mxu0 %v1743
        %1768 = vmatprep.subr.bf16.mxu0 0
        %1769 = vmatpush1.bf16.msra.mxu0 0
        %1770 = vmatprep.subr.bf16.mxu0 0
        %1771 = vmatpush1.bf16.msra.mxu0 0
        %1772 = vmatprep.subr.bf16.mxu0 0
        %1773 = vmatpush1.bf16.msra.mxu0 0
        %1774 = vmatprep.subr.bf16.mxu0 0
        %1775 = vmatpush1.bf16.msra.mxu0 0
        %1776 = vmatprep.subr.bf16.mxu0 0
        %1777 = vmatpush1.bf16.msra.mxu0 0
        %1778 = vmatprep.subr.bf16.mxu0 0
        %1779 = vmatpush1.bf16.msra.mxu0 0
        %1780 = vmatprep.subr.bf16.mxu0 0
        %1781 = vmatpush1.bf16.msra.mxu0 0
        %1782 = vmatprep.subr.bf16.mxu0 0
        %1783 = vmatpush1.bf16.msra.mxu0 0
        %1784 = vmatprep.mubr.bf16.mxu0 0
        %1785 = vmatmul.mubr.bf16.gmra.mrb[0].mxu0 %v1675
        %v1786 = vpop.f32.mrb[0].mxu0
        %v1787 = vadd.f32 0.0, %v1786
        %v1788 = vpop.f32.mrb[0].mxu0
        %v1789 = vpop.f32.mrb[0].mxu0
        %v1790 = vadd.f32 0.0, %v1789
        %v1791 = vpop.f32.mrb[0].mxu0
        %1792 = vmatprep.mubr.bf16.mxu0 0
        %1793 = vmatmul.mubr.bf16.gmra.mrb[0].mxu0 %v1677
        %v1794 = vpop.f32.mrb[0].mxu0
        %v1795 = vadd.f32 0.0, %v1794
        %v1796 = vpop.f32.mrb[0].mxu0
        %v1797 = vpop.f32.mrb[0].mxu0
        %v1798 = vadd.f32 0.0, %v1797
        %v1799 = vpop.f32.mrb[0].mxu0
        %1800 = vmatprep.mubr.bf16.mxu0 0
        %1801 = vmatmul.mubr.bf16.gmra.mrb[0].mxu0 %v1679
        %v1802 = vpop.f32.mrb[0].mxu0
        %v1803 = vadd.f32 0.0, %v1802
        %v1804 = vpop.f32.mrb[0].mxu0
        %v1805 = vpop.f32.mrb[0].mxu0
        %v1806 = vadd.f32 0.0, %v1805
        %v1807 = vpop.f32.mrb[0].mxu0
        %1808 = vmatprep.mubr.bf16.mxu0 0
        %1809 = vmatmul.mubr.bf16.gmra.mrb[0].mxu0 %v1681
        %v1810 = vpop.f32.mrb[0].mxu0
        %v1811 = vadd.f32 0.0, %v1810
        %v1812 = vpop.f32.mrb[0].mxu0
        %v1813 = vpop.f32.mrb[0].mxu0
        %v1814 = vadd.f32 0.0, %v1813
        %v1815 = vpop.f32.mrb[0].mxu0
        %1816 = vmatprep.mubr.bf16.mxu0 0
        %1817 = vmatmul.mubr.bf16.gmra.mrb[0].mxu0 %v1683
        %v1818 = vpop.f32.mrb[0].mxu0
        %v1819 = vadd.f32 0.0, %v1818
        %v1820 = vpop.f32.mrb[0].mxu0
        %v1821 = vpop.f32.mrb[0].mxu0
        %v1822 = vadd.f32 0.0, %v1821
        %v1823 = vpop.f32.mrb[0].mxu0
        %1824 = vmatprep.mubr.bf16.mxu0 0
        %1825 = vmatmul.mubr.bf16.gmra.mrb[0].mxu0 %v1685
        %v1826 = vpop.f32.mrb[0].mxu0
        %v1827 = vadd.f32 0.0, %v1826
        %v1828 = vpop.f32.mrb[0].mxu0
        %v1829 = vpop.f32.mrb[0].mxu0
        %v1830 = vadd.f32 0.0, %v1829
        %v1831 = vpop.f32.mrb[0].mxu0
        %1832 = vmatprep.mubr.bf16.mxu0 0
        %1833 = vmatmul.mubr.bf16.gmra.mrb[0].mxu0 %v1687
        %v1834 = vpop.f32.mrb[0].mxu0
        %v1835 = vadd.f32 0.0, %v1834
        %v1836 = vpop.f32.mrb[0].mxu0
        %v1837 = vpop.f32.mrb[0].mxu0
        %v1838 = vadd.f32 0.0, %v1837
        %v1839 = vpop.f32.mrb[0].mxu0
        %1840 = vmatprep.mubr.bf16.mxu0 0
        %1841 = vmatmul.mubr.bf16.gmra.mrb[0].mxu0 %v1689
        %v1842 = vpop.f32.mrb[0].mxu0
        %v1843 = vadd.f32 0.0, %v1842
        %v1844 = vpop.f32.mrb[0].mxu0
        %v1845 = vpop.f32.mrb[0].mxu0
        %v1846 = vadd.f32 0.0, %v1845
        %v1847 = vpop.f32.mrb[0].mxu0
        %1848 = vmatprep.mubr.bf16.mxu0 0
        %1849 = vmatmul.mubr.bf16.gmra.mrb[0].mxu0 %v1691
        %v1850 = vpop.f32.mrb[0].mxu0
        %v1851 = vadd.f32 0.0, %v1850
        %v1852 = vpop.f32.mrb[0].mxu0
        %v1853 = vpop.f32.mrb[0].mxu0
        %v1854 = vadd.f32 0.0, %v1853
        %v1855 = vpop.f32.mrb[0].mxu0
        %1856 = vmatprep.mubr.bf16.mxu0 0
        %1857 = vmatmul.mubr.bf16.gmra.mrb[0].mxu0 %v1693
        %v1858 = vpop.f32.mrb[0].mxu0
        %v1859 = vadd.f32 0.0, %v1858
        %v1860 = vpop.f32.mrb[0].mxu0
        %v1861 = vpop.f32.mrb[0].mxu0
        %v1862 = vadd.f32 0.0, %v1861
        %v1863 = vpop.f32.mrb[0].mxu0
        %1864 = vdwg.mxu0
        %v1865 = vadd.f32 %v1632, %v1787
        %v1866 = vadd.f32 %v1633, %v1790
        %v1867 = vadd.f32 %v1634, %v1795
        %v1868 = vadd.f32 %v1635, %v1798
        %v1869 = vadd.f32 %v1636, %v1803
        %v1870 = vadd.f32 %v1637, %v1806
        %v1871 = vadd.f32 %v1638, %v1811
        %v1872 = vadd.f32 %v1639, %v1814
        %v1873 = vadd.f32 %v1640, %v1819
        %v1874 = vadd.f32 %v1641, %v1822
        %v1875 = vadd.f32 %v1642, %v1827
        %v1876 = vadd.f32 %v1643, %v1830
        %v1877 = vadd.f32 %v1644, %v1835
        %v1878 = vadd.f32 %v1645, %v1838
        %v1879 = vadd.f32 %v1646, %v1843
        %v1880 = vadd.f32 %v1647, %v1846
        %v1881 = vadd.f32 %v1648, %v1851
        %v1882 = vadd.f32 %v1649, %v1854
        %v1883 = vadd.f32 %v1650, %v1859
        %v1884 = vadd.f32 %v1651, %v1862
        %v1885 = vld [vmem:[%s206 + $0x10] sm:$0xf]
        %v1886 = vld [vmem:[%s206 + $0x14] sm:$0xf]
        %v1887 = vld [vmem:[%s206 + $0x18] sm:$0xf]
        %v1888 = vld [vmem:[%s206 + $0x1c] sm:$0xf]
        %v1889 = vld [vmem:[%s206 + $0x20] sm:$0xf]
        %v1890 = vld [vmem:[%s206 + $0x24] sm:$0xf]
        %v1891 = vld [vmem:[%s206 + $0x28] sm:$0xf]
        %v1892 = vld [vmem:[%s206 + $0x2c] sm:$0xf]
        %v1893 = vld [vmem:[%s206 + $0x30] sm:$0xf]
        %v1894 = vld [vmem:[%s206 + $0x34] sm:$0xf]
        %v1895 = vld [vmem:[%s206 + $0x38] sm:$0xf]
        %v1896 = vld [vmem:[%s206 + $0x3c] sm:$0xf]
        %v1897 = vld [vmem:[%s206 + $0x40] sm:$0xf]
        %v1898 = vld [vmem:[%s206 + $0x44] sm:$0xf]
        %v1899 = vld [vmem:[%s206 + $0x48] sm:$0xf]
        %v1900 = vld [vmem:[%s206 + $0x4c] sm:$0xf]
        %v1901 = vld [vmem:[%s206 + $0x50] sm:$0xf]
        %v1902 = vld [vmem:[%s206 + $0x54] sm:$0xf]
        %v1903 = vld [vmem:[%s206 + $0x58] sm:$0xf]
        %v1904 = vld [vmem:[%s206 + $0x5c] sm:$0xf]
        %s1905 = scalar_lea.vmem [#allocation5], 384
        %v1906 = vld [vmem:[%s1905] sm:$0xf]
        %v1907 = vld [vmem:[%s1905 + $0x4] sm:$0xf]
        %v1908 = vld [vmem:[%s1905 + $0x8] sm:$0xf]
        %v1909 = vld [vmem:[%s1905 + $0xc] sm:$0xf]
        %v1910 = vld [vmem:[%s1905 + $0x10] sm:$0xf]
        %v1911 = vld [vmem:[%s1905 + $0x14] sm:$0xf]
        %v1912 = vld [vmem:[%s1905 + $0x18] sm:$0xf]
        %v1913 = vld [vmem:[%s1905 + $0x1c] sm:$0xf]
        %v1914 = vld [vmem:[%s1905 + $0x20] sm:$0xf]
        %v1915 = vld [vmem:[%s1905 + $0x24] sm:$0xf]
        %v1916 = vld [vmem:[%s1905 + $0x28] sm:$0xf]
        %v1917 = vld [vmem:[%s1905 + $0x2c] sm:$0xf]
        %v1918 = vld [vmem:[%s1905 + $0x30] sm:$0xf]
        %v1919 = vld [vmem:[%s1905 + $0x34] sm:$0xf]
        %v1920 = vld [vmem:[%s1905 + $0x38] sm:$0xf]
        %v1921 = vld [vmem:[%s1905 + $0x3c] sm:$0xf]
        %v1942 = vunpack.c.l.b16 %v1885
        %v1943 = vunpack.c.l.b16 %v1886
        %v1944 = vunpack.c.l.b16 %v1887
        %v1945 = vunpack.c.l.b16 %v1888
        %v1946 = vunpack.c.l.b16 %v1889
        %v1947 = vunpack.c.l.b16 %v1890
        %v1948 = vunpack.c.l.b16 %v1891
        %v1949 = vunpack.c.l.b16 %v1892
        %v1950 = vunpack.c.l.b16 %v1893
        %v1951 = vunpack.c.l.b16 %v1894
        %v1952 = vunpack.c.l.b16 %v1895
        %v1953 = vunpack.c.l.b16 %v1896
        %v1954 = vunpack.c.l.b16 %v1897
        %v1955 = vunpack.c.l.b16 %v1898
        %v1956 = vunpack.c.l.b16 %v1899
        %v1957 = vunpack.c.l.b16 %v1900
        %v1958 = vunpack.c.l.b16 %v1901
        %v1959 = vunpack.c.l.b16 %v1902
        %v1960 = vunpack.c.l.b16 %v1903
        %v1961 = vunpack.c.l.b16 %v1904
        %v1962 = vpack.c.b16 %v1943, %v1942
        %v1963 = vpack.c.b16 %v1945, %v1944
        %v1964 = vpack.c.b16 %v1947, %v1946
        %v1965 = vpack.c.b16 %v1949, %v1948
        %v1966 = vpack.c.b16 %v1951, %v1950
        %v1967 = vpack.c.b16 %v1953, %v1952
        %v1968 = vpack.c.b16 %v1955, %v1954
        %v1969 = vpack.c.b16 %v1957, %v1956
        %v1970 = vpack.c.b16 %v1959, %v1958
        %v1971 = vpack.c.b16 %v1961, %v1960
        %v1998 = vunpack.c.l.b16 %v1906
        %v1999 = vunpack.c.l.b16 %v1907
        %v2000 = vunpack.c.l.b16 %v1908
        %v2001 = vunpack.c.l.b16 %v1909
        %v2002 = vunpack.c.l.b16 %v1910
        %v2003 = vunpack.c.l.b16 %v1911
        %v2004 = vunpack.c.l.b16 %v1912
        %v2005 = vunpack.c.l.b16 %v1913
        %v2006 = vunpack.c.l.b16 %v1914
        %v2007 = vunpack.c.l.b16 %v1915
        %v2008 = vunpack.c.l.b16 %v1916
        %v2009 = vunpack.c.l.b16 %v1917
        %v2010 = vunpack.c.l.b16 %v1918
        %v2011 = vunpack.c.l.b16 %v1919
        %v2012 = vunpack.c.l.b16 %v1920
        %v2013 = vunpack.c.l.b16 %v1921
        %v2014 = vpack.c.b16 %v1999, %v1998
        %v2015 = vpack.c.b16 %v2001, %v2000
        %v2016 = vpack.c.b16 %v2003, %v2002
        %v2017 = vpack.c.b16 %v2005, %v2004
        %v2018 = vpack.c.b16 %v2007, %v2006
        %v2019 = vpack.c.b16 %v2009, %v2008
        %v2020 = vpack.c.b16 %v2011, %v2010
        %v2021 = vpack.c.b16 %v2013, %v2012
        %2030 = vmatprep.subr.bf16.mxu0 0
        %2031 = vmatpush1.bf16.msra.mxu0 %v2014
        %2032 = vmatprep.subr.bf16.mxu0 0
        %2033 = vmatpush1.bf16.msra.mxu0 %v2015
        %2034 = vmatprep.subr.bf16.mxu0 0
        %2035 = vmatpush1.bf16.msra.mxu0 %v2016
        %2036 = vmatprep.subr.bf16.mxu0 0
        %2037 = vmatpush1.bf16.msra.mxu0 %v2017
        %2038 = vmatprep.subr.bf16.mxu0 0
        %2039 = vmatpush1.bf16.msra.mxu0 %v2018
        %2040 = vmatprep.subr.bf16.mxu0 0
        %2041 = vmatpush1.bf16.msra.mxu0 %v2019
        %2042 = vmatprep.subr.bf16.mxu0 0
        %2043 = vmatpush1.bf16.msra.mxu0 %v2020
        %2044 = vmatprep.subr.bf16.mxu0 0
        %2045 = vmatpush1.bf16.msra.mxu0 %v2021
        %2046 = vmatprep.subr.bf16.mxu0 0
        %2047 = vmatpush1.bf16.msra.mxu0 0
        %2048 = vmatprep.subr.bf16.mxu0 0
        %2049 = vmatpush1.bf16.msra.mxu0 0
        %2050 = vmatprep.subr.bf16.mxu0 0
        %2051 = vmatpush1.bf16.msra.mxu0 0
        %2052 = vmatprep.subr.bf16.mxu0 0
        %2053 = vmatpush1.bf16.msra.mxu0 0
        %2054 = vmatprep.subr.bf16.mxu0 0
        %2055 = vmatpush1.bf16.msra.mxu0 0
        %2056 = vmatprep.subr.bf16.mxu0 0
        %2057 = vmatpush1.bf16.msra.mxu0 0
        %2058 = vmatprep.subr.bf16.mxu0 0
        %2059 = vmatpush1.bf16.msra.mxu0 0
        %2060 = vmatprep.subr.bf16.mxu0 0
        %2061 = vmatpush1.bf16.msra.mxu0 0
        %2062 = vmatprep.mubr.bf16.mxu0 0
        %2063 = vmatmul.mubr.bf16.gmra.mrb[0].mxu0 %v1962
        %v2064 = vpop.f32.mrb[0].mxu0
        %v2065 = vadd.f32 0.0, %v2064
        %v2066 = vpop.f32.mrb[0].mxu0
        %v2067 = vpop.f32.mrb[0].mxu0
        %v2068 = vadd.f32 0.0, %v2067
        %v2069 = vpop.f32.mrb[0].mxu0
        %2070 = vmatprep.mubr.bf16.mxu0 0
        %2071 = vmatmul.mubr.bf16.gmra.mrb[0].mxu0 %v1963
        %v2072 = vpop.f32.mrb[0].mxu0
        %v2073 = vadd.f32 0.0, %v2072
        %v2074 = vpop.f32.mrb[0].mxu0
        %v2075 = vpop.f32.mrb[0].mxu0
        %v2076 = vadd.f32 0.0, %v2075
        %v2077 = vpop.f32.mrb[0].mxu0
        %2078 = vmatprep.mubr.bf16.mxu0 0
        %2079 = vmatmul.mubr.bf16.gmra.mrb[0].mxu0 %v1964
        %v2080 = vpop.f32.mrb[0].mxu0
        %v2081 = vadd.f32 0.0, %v2080
        %v2082 = vpop.f32.mrb[0].mxu0
        %v2083 = vpop.f32.mrb[0].mxu0
        %v2084 = vadd.f32 0.0, %v2083
        %v2085 = vpop.f32.mrb[0].mxu0
        %2086 = vmatprep.mubr.bf16.mxu0 0
        %2087 = vmatmul.mubr.bf16.gmra.mrb[0].mxu0 %v1965
        %v2088 = vpop.f32.mrb[0].mxu0
        %v2089 = vadd.f32 0.0, %v2088
        %v2090 = vpop.f32.mrb[0].mxu0
        %v2091 = vpop.f32.mrb[0].mxu0
        %v2092 = vadd.f32 0.0, %v2091
        %v2093 = vpop.f32.mrb[0].mxu0
        %2094 = vmatprep.mubr.bf16.mxu0 0
        %2095 = vmatmul.mubr.bf16.gmra.mrb[0].mxu0 %v1966
        %v2096 = vpop.f32.mrb[0].mxu0
        %v2097 = vadd.f32 0.0, %v2096
        %v2098 = vpop.f32.mrb[0].mxu0
        %v2099 = vpop.f32.mrb[0].mxu0
        %v2100 = vadd.f32 0.0, %v2099
        %v2101 = vpop.f32.mrb[0].mxu0
        %2102 = vmatprep.mubr.bf16.mxu0 0
        %2103 = vmatmul.mubr.bf16.gmra.mrb[0].mxu0 %v1967
        %v2104 = vpop.f32.mrb[0].mxu0
        %v2105 = vadd.f32 0.0, %v2104
        %v2106 = vpop.f32.mrb[0].mxu0
        %v2107 = vpop.f32.mrb[0].mxu0
        %v2108 = vadd.f32 0.0, %v2107
        %v2109 = vpop.f32.mrb[0].mxu0
        %2110 = vmatprep.mubr.bf16.mxu0 0
        %2111 = vmatmul.mubr.bf16.gmra.mrb[0].mxu0 %v1968
        %v2112 = vpop.f32.mrb[0].mxu0
        %v2113 = vadd.f32 0.0, %v2112
        %v2114 = vpop.f32.mrb[0].mxu0
        %v2115 = vpop.f32.mrb[0].mxu0
        %v2116 = vadd.f32 0.0, %v2115
        %v2117 = vpop.f32.mrb[0].mxu0
        %2118 = vmatprep.mubr.bf16.mxu0 0
        %2119 = vmatmul.mubr.bf16.gmra.mrb[0].mxu0 %v1969
        %v2120 = vpop.f32.mrb[0].mxu0
        %v2121 = vadd.f32 0.0, %v2120
        %v2122 = vpop.f32.mrb[0].mxu0
        %v2123 = vpop.f32.mrb[0].mxu0
        %v2124 = vadd.f32 0.0, %v2123
        %v2125 = vpop.f32.mrb[0].mxu0
        %2126 = vmatprep.mubr.bf16.mxu0 0
        %2127 = vmatmul.mubr.bf16.gmra.mrb[0].mxu0 %v1970
        %v2128 = vpop.f32.mrb[0].mxu0
        %v2129 = vadd.f32 0.0, %v2128
        %v2130 = vpop.f32.mrb[0].mxu0
        %v2131 = vpop.f32.mrb[0].mxu0
        %v2132 = vadd.f32 0.0, %v2131
        %v2133 = vpop.f32.mrb[0].mxu0
        %2134 = vmatprep.mubr.bf16.mxu0 0
        %2135 = vmatmul.mubr.bf16.gmra.mrb[0].mxu0 %v1971
        %v2136 = vpop.f32.mrb[0].mxu0
        %v2137 = vadd.f32 0.0, %v2136
        %v2138 = vpop.f32.mrb[0].mxu0
        %v2139 = vpop.f32.mrb[0].mxu0
        %v2140 = vadd.f32 0.0, %v2139
        %v2141 = vpop.f32.mrb[0].mxu0
        %2142 = vdwg.mxu0
        %v2143 = vadd.f32 %v1865, %v2065
        %v2144 = vadd.f32 %v1866, %v2068
        %v2145 = vadd.f32 %v1867, %v2073
        %v2146 = vadd.f32 %v1868, %v2076
        %v2147 = vadd.f32 %v1869, %v2081
        %v2148 = vadd.f32 %v1870, %v2084
        %v2149 = vadd.f32 %v1871, %v2089
        %v2150 = vadd.f32 %v1872, %v2092
        %v2151 = vadd.f32 %v1873, %v2097
        %v2152 = vadd.f32 %v1874, %v2100
        %v2153 = vadd.f32 %v1875, %v2105
        %v2154 = vadd.f32 %v1876, %v2108
        %v2155 = vadd.f32 %v1877, %v2113
        %v2156 = vadd.f32 %v1878, %v2116
        %v2157 = vadd.f32 %v1879, %v2121
        %v2158 = vadd.f32 %v1880, %v2124
        %v2159 = vadd.f32 %v1881, %v2129
        %v2160 = vadd.f32 %v1882, %v2132
        %v2161 = vadd.f32 %v1883, %v2137
        %v2162 = vadd.f32 %v1884, %v2140
        %v2163 = vld [vmem:[%s206 + $0x10] sm:$0xf]
        %v2164 = vld [vmem:[%s206 + $0x14] sm:$0xf]
        %v2165 = vld [vmem:[%s206 + $0x18] sm:$0xf]
        %v2166 = vld [vmem:[%s206 + $0x1c] sm:$0xf]
        %v2167 = vld [vmem:[%s206 + $0x20] sm:$0xf]
        %v2168 = vld [vmem:[%s206 + $0x24] sm:$0xf]
        %v2169 = vld [vmem:[%s206 + $0x28] sm:$0xf]
        %v2170 = vld [vmem:[%s206 + $0x2c] sm:$0xf]
        %v2171 = vld [vmem:[%s206 + $0x30] sm:$0xf]
        %v2172 = vld [vmem:[%s206 + $0x34] sm:$0xf]
        %v2173 = vld [vmem:[%s206 + $0x38] sm:$0xf]
        %v2174 = vld [vmem:[%s206 + $0x3c] sm:$0xf]
        %v2175 = vld [vmem:[%s206 + $0x40] sm:$0xf]
        %v2176 = vld [vmem:[%s206 + $0x44] sm:$0xf]
        %v2177 = vld [vmem:[%s206 + $0x48] sm:$0xf]
        %v2178 = vld [vmem:[%s206 + $0x4c] sm:$0xf]
        %v2179 = vld [vmem:[%s206 + $0x50] sm:$0xf]
        %v2180 = vld [vmem:[%s206 + $0x54] sm:$0xf]
        %v2181 = vld [vmem:[%s206 + $0x58] sm:$0xf]
        %v2182 = vld [vmem:[%s206 + $0x5c] sm:$0xf]
        %v2183 = vld [vmem:[%s206 + $0x60] sm:$0x1]
        %s2184 = scalar_lea.vmem [#allocation5], 448
        %v2185 = vld [vmem:[%s2184] sm:$0xf]
        %v2186 = vld [vmem:[%s2184 + $0x4] sm:$0xf]
        %v2187 = vld [vmem:[%s2184 + $0x8] sm:$0xf]
        %v2188 = vld [vmem:[%s2184 + $0xc] sm:$0xf]
        %v2189 = vld [vmem:[%s2184 + $0x10] sm:$0xf]
        %v2190 = vld [vmem:[%s2184 + $0x14] sm:$0xf]
        %v2191 = vld [vmem:[%s2184 + $0x18] sm:$0xf]
        %v2192 = vld [vmem:[%s2184 + $0x1c] sm:$0xf]
        %v2193 = vld [vmem:[%s2184 + $0x20] sm:$0xf]
        %v2194 = vld [vmem:[%s2184 + $0x24] sm:$0xf]
        %v2195 = vld [vmem:[%s2184 + $0x28] sm:$0xf]
        %v2196 = vld [vmem:[%s2184 + $0x2c] sm:$0xf]
        %v2197 = vld [vmem:[%s2184 + $0x30] sm:$0xf]
        %v2198 = vld [vmem:[%s2184 + $0x34] sm:$0xf]
        %v2199 = vld [vmem:[%s2184 + $0x38] sm:$0xf]
        %v2200 = vld [vmem:[%s2184 + $0x3c] sm:$0xf]
        %v2222 = vunpack.c.l.b16 %v2163
        %v2223 = vunpack.c.l.b16 %v2164
        %v2224 = vunpack.c.l.b16 %v2165
        %v2225 = vunpack.c.l.b16 %v2166
        %v2226 = vunpack.c.l.b16 %v2167
        %v2227 = vunpack.c.l.b16 %v2168
        %v2228 = vunpack.c.l.b16 %v2169
        %v2229 = vunpack.c.l.b16 %v2170
        %v2230 = vunpack.c.l.b16 %v2171
        %v2231 = vunpack.c.l.b16 %v2172
        %v2232 = vunpack.c.l.b16 %v2173
        %v2233 = vunpack.c.l.b16 %v2174
        %v2234 = vunpack.c.l.b16 %v2175
        %v2235 = vunpack.c.l.b16 %v2176
        %v2236 = vunpack.c.l.b16 %v2177
        %v2237 = vunpack.c.l.b16 %v2178
        %v2238 = vunpack.c.l.b16 %v2179
        %v2239 = vunpack.c.l.b16 %v2180
        %v2240 = vunpack.c.l.b16 %v2181
        %v2241 = vunpack.c.l.b16 %v2182
        %v2242 = vunpack.c.l.b16 %v2183
        %v2243 = vpack.c.b16 %v2223, %v2222
        %v2244 = vpack.c.b16 %v2225, %v2224
        %v2245 = vpack.c.b16 %v2227, %v2226
        %v2246 = vpack.c.b16 %v2229, %v2228
        %v2247 = vpack.c.b16 %v2231, %v2230
        %v2248 = vpack.c.b16 %v2233, %v2232
        %v2249 = vpack.c.b16 %v2235, %v2234
        %v2250 = vpack.c.b16 %v2237, %v2236
        %v2251 = vpack.c.b16 %v2239, %v2238
        %v2252 = vpack.c.b16 %v2241, %v2240
        %v2253 = vpack.c.b16 %v2242, %v2242
        %v2255 = vshrl.u32 %v2243, 16
        %v2257 = vshll.u32 %v2243, 16
        %v2259 = vrot.slane %v2257, 1
        %v2260 = vor.u32 %v2255, %v2259
        %v2262 = vshll.u32 %v2244, 16
        %v2264 = vrot.slane %v2262, 1
        %v2265 = vsel %vm347, %v2260, %v2264
        %v2266 = vshrl.u32 %v2244, 16
        %v2268 = vor.u32 %v2266, %v2264
        %v2270 = vshll.u32 %v2245, 16
        %v2272 = vrot.slane %v2270, 1
        %v2273 = vsel %vm347, %v2268, %v2272
        %v2274 = vshrl.u32 %v2245, 16
        %v2276 = vor.u32 %v2274, %v2272
        %v2278 = vshll.u32 %v2246, 16
        %v2280 = vrot.slane %v2278, 1
        %v2281 = vsel %vm347, %v2276, %v2280
        %v2282 = vshrl.u32 %v2246, 16
        %v2284 = vor.u32 %v2282, %v2280
        %v2286 = vshll.u32 %v2247, 16
        %v2288 = vrot.slane %v2286, 1
        %v2289 = vsel %vm347, %v2284, %v2288
        %v2290 = vshrl.u32 %v2247, 16
        %v2292 = vor.u32 %v2290, %v2288
        %v2294 = vshll.u32 %v2248, 16
        %v2296 = vrot.slane %v2294, 1
        %v2297 = vsel %vm347, %v2292, %v2296
        %v2298 = vshrl.u32 %v2248, 16
        %v2300 = vor.u32 %v2298, %v2296
        %v2302 = vshll.u32 %v2249, 16
        %v2304 = vrot.slane %v2302, 1
        %v2305 = vsel %vm347, %v2300, %v2304
        %v2306 = vshrl.u32 %v2249, 16
        %v2308 = vor.u32 %v2306, %v2304
        %v2310 = vshll.u32 %v2250, 16
        %v2312 = vrot.slane %v2310, 1
        %v2313 = vsel %vm347, %v2308, %v2312
        %v2314 = vshrl.u32 %v2250, 16
        %v2316 = vor.u32 %v2314, %v2312
        %v2318 = vshll.u32 %v2251, 16
        %v2320 = vrot.slane %v2318, 1
        %v2321 = vsel %vm347, %v2316, %v2320
        %v2322 = vshrl.u32 %v2251, 16
        %v2324 = vor.u32 %v2322, %v2320
        %v2326 = vshll.u32 %v2252, 16
        %v2328 = vrot.slane %v2326, 1
        %v2329 = vsel %vm347, %v2324, %v2328
        %v2330 = vshrl.u32 %v2252, 16
        %v2332 = vor.u32 %v2330, %v2328
        %v2334 = vshll.u32 %v2253, 16
        %v2336 = vrot.slane %v2334, 1
        %v2337 = vsel %vm347, %v2332, %v2336
        %v2364 = vunpack.c.l.b16 %v2185
        %v2365 = vunpack.c.l.b16 %v2186
        %v2366 = vunpack.c.l.b16 %v2187
        %v2367 = vunpack.c.l.b16 %v2188
        %v2368 = vunpack.c.l.b16 %v2189
        %v2369 = vunpack.c.l.b16 %v2190
        %v2370 = vunpack.c.l.b16 %v2191
        %v2371 = vunpack.c.l.b16 %v2192
        %v2372 = vunpack.c.l.b16 %v2193
        %v2373 = vunpack.c.l.b16 %v2194
        %v2374 = vunpack.c.l.b16 %v2195
        %v2375 = vunpack.c.l.b16 %v2196
        %v2376 = vunpack.c.l.b16 %v2197
        %v2377 = vunpack.c.l.b16 %v2198
        %v2378 = vunpack.c.l.b16 %v2199
        %v2379 = vunpack.c.l.b16 %v2200
        %v2380 = vpack.c.b16 %v2365, %v2364
        %v2381 = vpack.c.b16 %v2367, %v2366
        %v2382 = vpack.c.b16 %v2369, %v2368
        %v2383 = vpack.c.b16 %v2371, %v2370
        %v2384 = vpack.c.b16 %v2373, %v2372
        %v2385 = vpack.c.b16 %v2375, %v2374
        %v2386 = vpack.c.b16 %v2377, %v2376
        %v2387 = vpack.c.b16 %v2379, %v2378
        %2396 = vmatprep.subr.bf16.mxu0 0
        %2397 = vmatpush1.bf16.msra.mxu0 %v2380
        %2398 = vmatprep.subr.bf16.mxu0 0
        %2399 = vmatpush1.bf16.msra.mxu0 %v2381
        %2400 = vmatprep.subr.bf16.mxu0 0
        %2401 = vmatpush1.bf16.msra.mxu0 %v2382
        %2402 = vmatprep.subr.bf16.mxu0 0
        %2403 = vmatpush1.bf16.msra.mxu0 %v2383
        %2404 = vmatprep.subr.bf16.mxu0 0
        %2405 = vmatpush1.bf16.msra.mxu0 %v2384
        %2406 = vmatprep.subr.bf16.mxu0 0
        %2407 = vmatpush1.bf16.msra.mxu0 %v2385
        %2408 = vmatprep.subr.bf16.mxu0 0
        %2409 = vmatpush1.bf16.msra.mxu0 %v2386
        %2410 = vmatprep.subr.bf16.mxu0 0
        %2411 = vmatpush1.bf16.msra.mxu0 %v2387
        %2412 = vmatprep.subr.bf16.mxu0 0
        %2413 = vmatpush1.bf16.msra.mxu0 0
        %2414 = vmatprep.subr.bf16.mxu0 0
        %2415 = vmatpush1.bf16.msra.mxu0 0
        %2416 = vmatprep.subr.bf16.mxu0 0
        %2417 = vmatpush1.bf16.msra.mxu0 0
        %2418 = vmatprep.subr.bf16.mxu0 0
        %2419 = vmatpush1.bf16.msra.mxu0 0
        %2420 = vmatprep.subr.bf16.mxu0 0
        %2421 = vmatpush1.bf16.msra.mxu0 0
        %2422 = vmatprep.subr.bf16.mxu0 0
        %2423 = vmatpush1.bf16.msra.mxu0 0
        %2424 = vmatprep.subr.bf16.mxu0 0
        %2425 = vmatpush1.bf16.msra.mxu0 0
        %2426 = vmatprep.subr.bf16.mxu0 0
        %2427 = vmatpush1.bf16.msra.mxu0 0
        %2428 = vmatprep.mubr.bf16.mxu0 0
        %2429 = vmatmul.mubr.bf16.gmra.mrb[0].mxu0 %v2265
        %v2430 = vpop.f32.mrb[0].mxu0
        %v2431 = vadd.f32 0.0, %v2430
        %v2432 = vpop.f32.mrb[0].mxu0
        %v2433 = vpop.f32.mrb[0].mxu0
        %v2434 = vadd.f32 0.0, %v2433
        %v2435 = vpop.f32.mrb[0].mxu0
        %2436 = vmatprep.mubr.bf16.mxu0 0
        %2437 = vmatmul.mubr.bf16.gmra.mrb[0].mxu0 %v2273
        %v2438 = vpop.f32.mrb[0].mxu0
        %v2439 = vadd.f32 0.0, %v2438
        %v2440 = vpop.f32.mrb[0].mxu0
        %v2441 = vpop.f32.mrb[0].mxu0
        %v2442 = vadd.f32 0.0, %v2441
        %v2443 = vpop.f32.mrb[0].mxu0
        %2444 = vmatprep.mubr.bf16.mxu0 0
        %2445 = vmatmul.mubr.bf16.gmra.mrb[0].mxu0 %v2281
        %v2446 = vpop.f32.mrb[0].mxu0
        %v2447 = vadd.f32 0.0, %v2446
        %v2448 = vpop.f32.mrb[0].mxu0
        %v2449 = vpop.f32.mrb[0].mxu0
        %v2450 = vadd.f32 0.0, %v2449
        %v2451 = vpop.f32.mrb[0].mxu0
        %2452 = vmatprep.mubr.bf16.mxu0 0
        %2453 = vmatmul.mubr.bf16.gmra.mrb[0].mxu0 %v2289
        %v2454 = vpop.f32.mrb[0].mxu0
        %v2455 = vadd.f32 0.0, %v2454
        %v2456 = vpop.f32.mrb[0].mxu0
        %v2457 = vpop.f32.mrb[0].mxu0
        %v2458 = vadd.f32 0.0, %v2457
        %v2459 = vpop.f32.mrb[0].mxu0
        %2460 = vmatprep.mubr.bf16.mxu0 0
        %2461 = vmatmul.mubr.bf16.gmra.mrb[0].mxu0 %v2297
        %v2462 = vpop.f32.mrb[0].mxu0
        %v2463 = vadd.f32 0.0, %v2462
        %v2464 = vpop.f32.mrb[0].mxu0
        %v2465 = vpop.f32.mrb[0].mxu0
        %v2466 = vadd.f32 0.0, %v2465
        %v2467 = vpop.f32.mrb[0].mxu0
        %2468 = vmatprep.mubr.bf16.mxu0 0
        %2469 = vmatmul.mubr.bf16.gmra.mrb[0].mxu0 %v2305
        %v2470 = vpop.f32.mrb[0].mxu0
        %v2471 = vadd.f32 0.0, %v2470
        %v2472 = vpop.f32.mrb[0].mxu0
        %v2473 = vpop.f32.mrb[0].mxu0
        %v2474 = vadd.f32 0.0, %v2473
        %v2475 = vpop.f32.mrb[0].mxu0
        %2476 = vmatprep.mubr.bf16.mxu0 0
        %2477 = vmatmul.mubr.bf16.gmra.mrb[0].mxu0 %v2313
        %v2478 = vpop.f32.mrb[0].mxu0
        %v2479 = vadd.f32 0.0, %v2478
        %v2480 = vpop.f32.mrb[0].mxu0
        %v2481 = vpop.f32.mrb[0].mxu0
        %v2482 = vadd.f32 0.0, %v2481
        %v2483 = vpop.f32.mrb[0].mxu0
        %2484 = vmatprep.mubr.bf16.mxu0 0
        %2485 = vmatmul.mubr.bf16.gmra.mrb[0].mxu0 %v2321
        %v2486 = vpop.f32.mrb[0].mxu0
        %v2487 = vadd.f32 0.0, %v2486
        %v2488 = vpop.f32.mrb[0].mxu0
        %v2489 = vpop.f32.mrb[0].mxu0
        %v2490 = vadd.f32 0.0, %v2489
        %v2491 = vpop.f32.mrb[0].mxu0
        %2492 = vmatprep.mubr.bf16.mxu0 0
        %2493 = vmatmul.mubr.bf16.gmra.mrb[0].mxu0 %v2329
        %v2494 = vpop.f32.mrb[0].mxu0
        %v2495 = vadd.f32 0.0, %v2494
        %v2496 = vpop.f32.mrb[0].mxu0
        %v2497 = vpop.f32.mrb[0].mxu0
        %v2498 = vadd.f32 0.0, %v2497
        %v2499 = vpop.f32.mrb[0].mxu0
        %2500 = vmatprep.mubr.bf16.mxu0 0
        %2501 = vmatmul.mubr.bf16.gmra.mrb[0].mxu0 %v2337
        %v2502 = vpop.f32.mrb[0].mxu0
        %v2503 = vadd.f32 0.0, %v2502
        %v2504 = vpop.f32.mrb[0].mxu0
        %v2505 = vpop.f32.mrb[0].mxu0
        %v2506 = vadd.f32 0.0, %v2505
        %v2507 = vpop.f32.mrb[0].mxu0
        %2508 = vdwg.mxu0
        %v2509 = vadd.f32 %v2143, %v2431
        %v2510 = vadd.f32 %v2144, %v2434
        %v2511 = vadd.f32 %v2145, %v2439
        %v2512 = vadd.f32 %v2146, %v2442
        %v2513 = vadd.f32 %v2147, %v2447
        %v2514 = vadd.f32 %v2148, %v2450
        %v2515 = vadd.f32 %v2149, %v2455
        %v2516 = vadd.f32 %v2150, %v2458
        %v2517 = vadd.f32 %v2151, %v2463
        %v2518 = vadd.f32 %v2152, %v2466
        %v2519 = vadd.f32 %v2153, %v2471
        %v2520 = vadd.f32 %v2154, %v2474
        %v2521 = vadd.f32 %v2155, %v2479
        %v2522 = vadd.f32 %v2156, %v2482
        %v2523 = vadd.f32 %v2157, %v2487
        %v2524 = vadd.f32 %v2158, %v2490
        %v2525 = vadd.f32 %v2159, %v2495
        %v2526 = vadd.f32 %v2160, %v2498
        %v2527 = vadd.f32 %v2161, %v2503
        %v2528 = vadd.f32 %v2162, %v2506
        %v2529 = vld [vmem:[%s206 + $0x10] sm:$0xe]
        %s2530 = scalar_lea.vmem [#allocation5], 512
        %v2531 = vld [vmem:[%s2530] sm:$0xf]
        %v2532 = vld [vmem:[%s2530 + $0x4] sm:$0xf]
        %v2533 = vld [vmem:[%s2530 + $0x8] sm:$0xf]
        %v2534 = vld [vmem:[%s2530 + $0xc] sm:$0xf]
        %v2535 = vld [vmem:[%s2530 + $0x10] sm:$0xf]
        %v2536 = vld [vmem:[%s2530 + $0x14] sm:$0xf]
        %v2537 = vld [vmem:[%s2530 + $0x18] sm:$0xf]
        %v2538 = vld [vmem:[%s2530 + $0x1c] sm:$0xf]
        %v2539 = vld [vmem:[%s2530 + $0x20] sm:$0xf]
        %v2540 = vld [vmem:[%s2530 + $0x24] sm:$0xf]
        %v2541 = vld [vmem:[%s2530 + $0x28] sm:$0xf]
        %v2542 = vld [vmem:[%s2530 + $0x2c] sm:$0xf]
        %v2543 = vld [vmem:[%s2530 + $0x30] sm:$0xf]
        %v2544 = vld [vmem:[%s2530 + $0x34] sm:$0xf]
        %v2545 = vld [vmem:[%s2530 + $0x38] sm:$0xf]
        %v2546 = vld [vmem:[%s2530 + $0x3c] sm:$0xf]
        %v2548 = vunpack.c.l.b16 %v2529
        %v2549 = vpack.c.b16 %v2223, %v2548
        %v2550 = vrot.slane %v2549, 1
        %v2551 = vrot.slane %v2244, 1
        %v2552 = vsel %vm795, %v2550, %v2551
        %v2553 = vrot.slane %v2245, 1
        %v2554 = vsel %vm795, %v2551, %v2553
        %v2555 = vrot.slane %v2246, 1
        %v2556 = vsel %vm795, %v2553, %v2555
        %v2557 = vrot.slane %v2247, 1
        %v2558 = vsel %vm795, %v2555, %v2557
        %v2559 = vrot.slane %v2248, 1
        %v2560 = vsel %vm795, %v2557, %v2559
        %v2561 = vrot.slane %v2249, 1
        %v2562 = vsel %vm795, %v2559, %v2561
        %v2563 = vrot.slane %v2250, 1
        %v2564 = vsel %vm795, %v2561, %v2563
        %v2565 = vrot.slane %v2251, 1
        %v2566 = vsel %vm795, %v2563, %v2565
        %v2567 = vrot.slane %v2252, 1
        %v2568 = vsel %vm795, %v2565, %v2567
        %v2569 = vrot.slane %v2253, 1
        %v2570 = vsel %vm795, %v2567, %v2569
        %v2597 = vunpack.c.l.b16 %v2531
        %v2598 = vunpack.c.l.b16 %v2532
        %v2599 = vunpack.c.l.b16 %v2533
        %v2600 = vunpack.c.l.b16 %v2534
        %v2601 = vunpack.c.l.b16 %v2535
        %v2602 = vunpack.c.l.b16 %v2536
        %v2603 = vunpack.c.l.b16 %v2537
        %v2604 = vunpack.c.l.b16 %v2538
        %v2605 = vunpack.c.l.b16 %v2539
        %v2606 = vunpack.c.l.b16 %v2540
        %v2607 = vunpack.c.l.b16 %v2541
        %v2608 = vunpack.c.l.b16 %v2542
        %v2609 = vunpack.c.l.b16 %v2543
        %v2610 = vunpack.c.l.b16 %v2544
        %v2611 = vunpack.c.l.b16 %v2545
        %v2612 = vunpack.c.l.b16 %v2546
        %v2613 = vpack.c.b16 %v2598, %v2597
        %v2614 = vpack.c.b16 %v2600, %v2599
        %v2615 = vpack.c.b16 %v2602, %v2601
        %v2616 = vpack.c.b16 %v2604, %v2603
        %v2617 = vpack.c.b16 %v2606, %v2605
        %v2618 = vpack.c.b16 %v2608, %v2607
        %v2619 = vpack.c.b16 %v2610, %v2609
        %v2620 = vpack.c.b16 %v2612, %v2611
        %2629 = vmatprep.subr.bf16.mxu0 0
        %2630 = vmatpush1.bf16.msra.mxu0 %v2613
        %2631 = vmatprep.subr.bf16.mxu0 0
        %2632 = vmatpush1.bf16.msra.mxu0 %v2614
        %2633 = vmatprep.subr.bf16.mxu0 0
        %2634 = vmatpush1.bf16.msra.mxu0 %v2615
        %2635 = vmatprep.subr.bf16.mxu0 0
        %2636 = vmatpush1.bf16.msra.mxu0 %v2616
        %2637 = vmatprep.subr.bf16.mxu0 0
        %2638 = vmatpush1.bf16.msra.mxu0 %v2617
        %2639 = vmatprep.subr.bf16.mxu0 0
        %2640 = vmatpush1.bf16.msra.mxu0 %v2618
        %2641 = vmatprep.subr.bf16.mxu0 0
        %2642 = vmatpush1.bf16.msra.mxu0 %v2619
        %2643 = vmatprep.subr.bf16.mxu0 0
        %2644 = vmatpush1.bf16.msra.mxu0 %v2620
        %2645 = vmatprep.subr.bf16.mxu0 0
        %2646 = vmatpush1.bf16.msra.mxu0 0
        %2647 = vmatprep.subr.bf16.mxu0 0
        %2648 = vmatpush1.bf16.msra.mxu0 0
        %2649 = vmatprep.subr.bf16.mxu0 0
        %2650 = vmatpush1.bf16.msra.mxu0 0
        %2651 = vmatprep.subr.bf16.mxu0 0
        %2652 = vmatpush1.bf16.msra.mxu0 0
        %2653 = vmatprep.subr.bf16.mxu0 0
        %2654 = vmatpush1.bf16.msra.mxu0 0
        %2655 = vmatprep.subr.bf16.mxu0 0
        %2656 = vmatpush1.bf16.msra.mxu0 0
        %2657 = vmatprep.subr.bf16.mxu0 0
        %2658 = vmatpush1.bf16.msra.mxu0 0
        %2659 = vmatprep.subr.bf16.mxu0 0
        %2660 = vmatpush1.bf16.msra.mxu0 0
        %2661 = vmatprep.mubr.bf16.mxu0 0
        %2662 = vmatmul.mubr.bf16.gmra.mrb[0].mxu0 %v2552
        %v2663 = vpop.f32.mrb[0].mxu0
        %v2664 = vadd.f32 0.0, %v2663
        %v2665 = vpop.f32.mrb[0].mxu0
        %v2666 = vpop.f32.mrb[0].mxu0
        %v2667 = vadd.f32 0.0, %v2666
        %v2668 = vpop.f32.mrb[0].mxu0
        %2669 = vmatprep.mubr.bf16.mxu0 0
        %2670 = vmatmul.mubr.bf16.gmra.mrb[0].mxu0 %v2554
        %v2671 = vpop.f32.mrb[0].mxu0
        %v2672 = vadd.f32 0.0, %v2671
        %v2673 = vpop.f32.mrb[0].mxu0
        %v2674 = vpop.f32.mrb[0].mxu0
        %v2675 = vadd.f32 0.0, %v2674
        %v2676 = vpop.f32.mrb[0].mxu0
        %2677 = vmatprep.mubr.bf16.mxu0 0
        %2678 = vmatmul.mubr.bf16.gmra.mrb[0].mxu0 %v2556
        %v2679 = vpop.f32.mrb[0].mxu0
        %v2680 = vadd.f32 0.0, %v2679
        %v2681 = vpop.f32.mrb[0].mxu0
        %v2682 = vpop.f32.mrb[0].mxu0
        %v2683 = vadd.f32 0.0, %v2682
        %v2684 = vpop.f32.mrb[0].mxu0
        %2685 = vmatprep.mubr.bf16.mxu0 0
        %2686 = vmatmul.mubr.bf16.gmra.mrb[0].mxu0 %v2558
        %v2687 = vpop.f32.mrb[0].mxu0
        %v2688 = vadd.f32 0.0, %v2687
        %v2689 = vpop.f32.mrb[0].mxu0
        %v2690 = vpop.f32.mrb[0].mxu0
        %v2691 = vadd.f32 0.0, %v2690
        %v2692 = vpop.f32.mrb[0].mxu0
        %2693 = vmatprep.mubr.bf16.mxu0 0
        %2694 = vmatmul.mubr.bf16.gmra.mrb[0].mxu0 %v2560
        %v2695 = vpop.f32.mrb[0].mxu0
        %v2696 = vadd.f32 0.0, %v2695
        %v2697 = vpop.f32.mrb[0].mxu0
        %v2698 = vpop.f32.mrb[0].mxu0
        %v2699 = vadd.f32 0.0, %v2698
        %v2700 = vpop.f32.mrb[0].mxu0
        %2701 = vmatprep.mubr.bf16.mxu0 0
        %2702 = vmatmul.mubr.bf16.gmra.mrb[0].mxu0 %v2562
        %v2703 = vpop.f32.mrb[0].mxu0
        %v2704 = vadd.f32 0.0, %v2703
        %v2705 = vpop.f32.mrb[0].mxu0
        %v2706 = vpop.f32.mrb[0].mxu0
        %v2707 = vadd.f32 0.0, %v2706
        %v2708 = vpop.f32.mrb[0].mxu0
        %2709 = vmatprep.mubr.bf16.mxu0 0
        %2710 = vmatmul.mubr.bf16.gmra.mrb[0].mxu0 %v2564
        %v2711 = vpop.f32.mrb[0].mxu0
        %v2712 = vadd.f32 0.0, %v2711
        %v2713 = vpop.f32.mrb[0].mxu0
        %v2714 = vpop.f32.mrb[0].mxu0
        %v2715 = vadd.f32 0.0, %v2714
        %v2716 = vpop.f32.mrb[0].mxu0
        %2717 = vmatprep.mubr.bf16.mxu0 0
        %2718 = vmatmul.mubr.bf16.gmra.mrb[0].mxu0 %v2566
        %v2719 = vpop.f32.mrb[0].mxu0
        %v2720 = vadd.f32 0.0, %v2719
        %v2721 = vpop.f32.mrb[0].mxu0
        %v2722 = vpop.f32.mrb[0].mxu0
        %v2723 = vadd.f32 0.0, %v2722
        %v2724 = vpop.f32.mrb[0].mxu0
        %2725 = vmatprep.mubr.bf16.mxu0 0
        %2726 = vmatmul.mubr.bf16.gmra.mrb[0].mxu0 %v2568
        %v2727 = vpop.f32.mrb[0].mxu0
        %v2728 = vadd.f32 0.0, %v2727
        %v2729 = vpop.f32.mrb[0].mxu0
        %v2730 = vpop.f32.mrb[0].mxu0
        %v2731 = vadd.f32 0.0, %v2730
        %v2732 = vpop.f32.mrb[0].mxu0
        %2733 = vmatprep.mubr.bf16.mxu0 0
        %2734 = vmatmul.mubr.bf16.gmra.mrb[0].mxu0 %v2570
        %v2735 = vpop.f32.mrb[0].mxu0
        %v2736 = vadd.f32 0.0, %v2735
        %v2737 = vpop.f32.mrb[0].mxu0
        %v2738 = vpop.f32.mrb[0].mxu0
        %v2739 = vadd.f32 0.0, %v2738
        %v2740 = vpop.f32.mrb[0].mxu0
        %2741 = vdwg.mxu0
        %v2742 = vadd.f32 %v2509, %v2664
        %v2743 = vadd.f32 %v2510, %v2667
        %v2744 = vadd.f32 %v2511, %v2672
        %v2745 = vadd.f32 %v2512, %v2675
        %v2746 = vadd.f32 %v2513, %v2680
        %v2747 = vadd.f32 %v2514, %v2683
        %v2748 = vadd.f32 %v2515, %v2688
        %v2749 = vadd.f32 %v2516, %v2691
        %v2750 = vadd.f32 %v2517, %v2696
        %v2751 = vadd.f32 %v2518, %v2699
        %v2752 = vadd.f32 %v2519, %v2704
        %v2753 = vadd.f32 %v2520, %v2707
        %v2754 = vadd.f32 %v2521, %v2712
        %v2755 = vadd.f32 %v2522, %v2715
        %v2756 = vadd.f32 %v2523, %v2720
        %v2757 = vadd.f32 %v2524, %v2723
        %v2758 = vadd.f32 %v2525, %v2728
        %v2759 = vadd.f32 %v2526, %v2731
        %v2760 = vadd.f32 %v2527, %v2736
        %v2761 = vadd.f32 %v2528, %v2739
        %v2762 = vld [vmem:[%s238] sm:$0x1]
        %v2764 = vlaneseq
        %v2765 = vshrl.u32 %v2764, 7
        %v2766 = vsub.s32 0, %v2765
        %v2767 = vrot.slane %v2762, %v2766
        %v2769 = vadd.f32 %v2742, %v2767
        %v2770 = vadd.f32 %v2743, %v2767
        %v2771 = vadd.f32 %v2744, %v2767
        %v2772 = vadd.f32 %v2745, %v2767
        %v2773 = vadd.f32 %v2746, %v2767
        %v2774 = vadd.f32 %v2747, %v2767
        %v2775 = vadd.f32 %v2748, %v2767
        %v2776 = vadd.f32 %v2749, %v2767
        %v2777 = vadd.f32 %v2750, %v2767
        %v2778 = vadd.f32 %v2751, %v2767
        %v2779 = vadd.f32 %v2752, %v2767
        %v2780 = vadd.f32 %v2753, %v2767
        %v2781 = vadd.f32 %v2754, %v2767
        %v2782 = vadd.f32 %v2755, %v2767
        %v2783 = vadd.f32 %v2756, %v2767
        %v2784 = vadd.f32 %v2757, %v2767
        %v2785 = vadd.f32 %v2758, %v2767
        %v2786 = vadd.f32 %v2759, %v2767
        %v2787 = vadd.f32 %v2760, %v2767
        %v2788 = vadd.f32 %v2761, %v2767
        %v2789 = vmax.f32 %v2769, 0.0
        %v2790 = vmax.f32 %v2770, 0.0
        %v2791 = vmax.f32 %v2771, 0.0
        %v2792 = vmax.f32 %v2772, 0.0
        %v2793 = vmax.f32 %v2773, 0.0
        %v2794 = vmax.f32 %v2774, 0.0
        %v2795 = vmax.f32 %v2775, 0.0
        %v2796 = vmax.f32 %v2776, 0.0
        %v2797 = vmax.f32 %v2777, 0.0
        %v2798 = vmax.f32 %v2778, 0.0
        %v2799 = vmax.f32 %v2779, 0.0
        %v2800 = vmax.f32 %v2780, 0.0
        %v2801 = vmax.f32 %v2781, 0.0
        %v2802 = vmax.f32 %v2782, 0.0
        %v2803 = vmax.f32 %v2783, 0.0
        %v2804 = vmax.f32 %v2784, 0.0
        %v2805 = vmax.f32 %v2785, 0.0
        %v2806 = vmax.f32 %v2786, 0.0
        %v2807 = vmax.f32 %v2787, 0.0
        %v2808 = vmax.f32 %v2788, 0.0
        %v2809 = vpack.c.bf16 %v2790, %v2789
        %v2810 = vpack.c.bf16 %v2792, %v2791
        %v2811 = vpack.c.bf16 %v2794, %v2793
        %v2812 = vpack.c.bf16 %v2796, %v2795
        %v2813 = vpack.c.bf16 %v2798, %v2797
        %v2814 = vpack.c.bf16 %v2800, %v2799
        %v2815 = vpack.c.bf16 %v2802, %v2801
        %v2816 = vpack.c.bf16 %v2804, %v2803
        %v2817 = vpack.c.bf16 %v2806, %v2805
        %v2818 = vpack.c.bf16 %v2808, %v2807
        %v2829 = vunpack.c.l.b16 %v2809
        %v2830 = vunpack.c.h.b16 %v2809
        %v2831 = vunpack.c.l.b16 %v2810
        %v2832 = vunpack.c.h.b16 %v2810
        %v2833 = vunpack.c.l.b16 %v2811
        %v2834 = vunpack.c.h.b16 %v2811
        %v2835 = vunpack.c.l.b16 %v2812
        %v2836 = vunpack.c.h.b16 %v2812
        %v2837 = vunpack.c.l.b16 %v2813
        %v2838 = vunpack.c.h.b16 %v2813
        %v2839 = vunpack.c.l.b16 %v2814
        %v2840 = vunpack.c.h.b16 %v2814
        %v2841 = vunpack.c.l.b16 %v2815
        %v2842 = vunpack.c.h.b16 %v2815
        %v2843 = vunpack.c.l.b16 %v2816
        %v2844 = vunpack.c.h.b16 %v2816
        %v2845 = vunpack.c.l.b16 %v2817
        %v2846 = vunpack.c.h.b16 %v2817
        %v2847 = vunpack.c.l.b16 %v2818
        %v2848 = vunpack.c.h.b16 %v2818
        %v2849 = vpack.c.b16 %v2829, %v2829
        %v2850 = vpack.c.b16 %v2830, %v2830
        %v2851 = vpack.c.b16 %v2831, %v2831
        %v2852 = vpack.c.b16 %v2832, %v2832
        %v2853 = vpack.c.b16 %v2833, %v2833
        %v2854 = vpack.c.b16 %v2834, %v2834
        %v2855 = vpack.c.b16 %v2835, %v2835
        %v2856 = vpack.c.b16 %v2836, %v2836
        %v2857 = vpack.c.b16 %v2837, %v2837
        %v2858 = vpack.c.b16 %v2838, %v2838
        %v2859 = vpack.c.b16 %v2839, %v2839
        %v2860 = vpack.c.b16 %v2840, %v2840
        %v2861 = vpack.c.b16 %v2841, %v2841
        %v2862 = vpack.c.b16 %v2842, %v2842
        %v2863 = vpack.c.b16 %v2843, %v2843
        %v2864 = vpack.c.b16 %v2844, %v2844
        %v2865 = vpack.c.b16 %v2845, %v2845
        %v2866 = vpack.c.b16 %v2846, %v2846
        %v2867 = vpack.c.b16 %v2847, %v2847
        %v2868 = vpack.c.b16 %v2848, %v2848
        %2889 = vst [vmem:[%s235] sm:$0xf] %v2849
        %2890 = vst [vmem:[%s235 + $0x4] sm:$0xf] %v2850
        %2891 = vst [vmem:[%s235 + $0x8] sm:$0xf] %v2851
        %2892 = vst [vmem:[%s235 + $0xc] sm:$0xf] %v2852
        %2893 = vst [vmem:[%s235 + $0x10] sm:$0xf] %v2853
        %2894 = vst [vmem:[%s235 + $0x14] sm:$0xf] %v2854
        %2895 = vst [vmem:[%s235 + $0x18] sm:$0xf] %v2855
        %2896 = vst [vmem:[%s235 + $0x1c] sm:$0xf] %v2856
        %2897 = vst [vmem:[%s235 + $0x20] sm:$0xf] %v2857
        %2898 = vst [vmem:[%s235 + $0x24] sm:$0xf] %v2858
        %2899 = vst [vmem:[%s235 + $0x28] sm:$0xf] %v2859
        %2900 = vst [vmem:[%s235 + $0x2c] sm:$0xf] %v2860
        %2901 = vst [vmem:[%s235 + $0x30] sm:$0xf] %v2861
        %2902 = vst [vmem:[%s235 + $0x34] sm:$0xf] %v2862
        %2903 = vst [vmem:[%s235 + $0x38] sm:$0xf] %v2863
        %2904 = vst [vmem:[%s235 + $0x3c] sm:$0xf] %v2864
        %2905 = vst [vmem:[%s235 + $0x40] sm:$0xf] %v2865
        %2906 = vst [vmem:[%s235 + $0x44] sm:$0xf] %v2866
        %2907 = vst [vmem:[%s235 + $0x48] sm:$0xf] %v2867
        %2908 = vst [vmem:[%s235 + $0x4c] sm:$0xf] %v2868
        %s2909 = sand.u32 %s121, 1
        %s2910 = scalar_lea.sflag [#allocation4], %s2909
        %s2911 = sand.u32 %s121, 1
        %s2912 = smul.addr %s2911, 80
        %s2913 = scalar_lea.vmem [#allocation7], %s2912
        // Predicated region
        $region41: #{tpu_custom_call.1} parent=31 // pred_check
          %p2914 = pneg %p131
        $region42: #{tpu_custom_call.1} parent=31 // pred_check_branch
          %2916 = sbr.rel (%p2914) target = $region44
        $region43: #{tpu_custom_call.1} parent=31 // pred_region
          %s2918 = ssub.s32 1280, 1280
          %2919 = vsyncadd %s2910, %s2918
          %s2920 = smul.addr %s25, 20
          %s2921 = sadd.s32 %s26, %s2920
          %s2922 = smul.addr %s2921, 64
          %s2923 = scalar_lea.hbm %s3, %s2922
          %s2924 = sshll.u32 %s2913, 4
          %s2925 = int_to_ptr.vmem [resolvable:$true] %s2924
          %2930 = dma.vmem_to_hbm [thread:$0]  %s2925, 1280, %s2923, %s2910, 64, 64, 4
        $region44: #{tpu_custom_call.1} parent=31 // pred_fallthru
          _
      $region32: #{tpu_custom_call.1} parent=5 // pred_fallthru
        _
      %p2931 = scmp.le.s32.totalorder 2, %s16
      // Predicated region
      $region45: #{tpu_custom_call.1} parent=5 // pred_check
        %p2932 = pneg %p2931
      $region46: #{tpu_custom_call.1} parent=5 // pred_check_branch
        %2934 = sbr.rel (%p2932) target = $region48
      $region47: #{tpu_custom_call.1} parent=5 // pred_region
        %s2935 = ssub.s32 %s16, 2
        // Predicated region
        $region49: #{tpu_custom_call.1} parent=47 // pred_check
          %p2936 = pneg %p137
        $region50: #{tpu_custom_call.1} parent=47 // pred_check_branch
          %2938 = sbr.rel (%p2936) target = $region52
        $region51: #{tpu_custom_call.1} parent=47 // pred_region
          %s2939 = sand.u32 %s122, 1
          %s2940 = scalar_lea.sflag [#allocation4], %s2939
          %s2941 = sand.u32 %s122, 1
          %s2942 = smul.addr %s2941, 80
          %s2943 = scalar_lea.vmem [#allocation7], %s2942
          %2944 = dma.done %s2940, 1280
        $region52: #{tpu_custom_call.1} parent=47 // pred_fallthru
          _
      $region48: #{tpu_custom_call.1} parent=5 // pred_fallthru
        _
    $region6: #{tpu_custom_call.1} parent=1 // loop_footer
      %s20 = sadd.s32 1, %s16
    $region7: #{tpu_custom_call.1} parent=1 // loop_footer_branch
      %15 = sbr.rel target = $region3
    $region8: #{tpu_custom_call.1} parent=1 // loop_exit
      _
    %2945 = vsyncpa [#allocation3], 1
    %s2946 = scalar_lea.sflag [#allocation3], 1
    %2947 = vsyncpa %s2946, 1
    %2948 = vsyncpa [#allocation6], 1
    %2949 = vsyncpa [#allocation4], 1
    %s2950 = scalar_lea.sflag [#allocation4], 1
    %2951 = vsyncpa %s2950, 1

</llo_original>
